<compile_context>
chip_gen: v5e
topology: v5e:2x2
jax: 0.10.0
libtpu: 0.0.40
codegen_flags: <defaults>
</compile_context>

<pallas_src>
import numpy as np
import jax
import jax.numpy as jnp
from jax.experimental import pallas as pl
from jax.experimental.pallas import tpu as pltpu

EPS = 1e-5  # PyTorch InstanceNorm2d default


# ------------------------------ layout math -------------------------------- #

def _round_up(x, m):
    return (x + m - 1) // m * m


def _layout(H, W):
    """Static lane-buffer layout.

    All in-kernel arrays live on a flattened padded-image coordinate system:
    buffer index OFF + hp*Wp + wp  <->  padded pixel (hp, wp), hp<Hp, wp<Wp.
    A 3x3 conv output at buffer index i reads input at i + (ky-1)*Wp + (kx-1),
    so convs become 9 statically-shifted lane slices + matmuls.
    """
    Hp, Wp = H + 2, W + 2
    NP = Hp * Wp                 # padded pixel count
    D = Wp + 1                   # max conv displacement
    R = 2 * Wp                   # row-reflection displacement
    OFF = max(128, _round_up(2 * D + R + 2, 128))   # buffer origin of padded image
    E, SE = OFF, _round_up(NP, 128)                 # output slab (base, width)
    B = E - D                                       # reflection-padded h1 slab
    SB = SE + 2 * D
    A = B - (R + 2)                                 # conv1 output slab
    SA = SB + 2 * (R + 2)
    T = _round_up(max(A + D + SA, OFF + NP, B + R + SB, E + SE, A + SA), 128)

    # static bound checks for every in-kernel slice
    assert A - D >= 0 and A + D + SA <= T
    assert (B - A) - (R + 2) >= 0 and (B - A) + (R + 2) + SB <= SA
    assert B - R >= 0 and B + R + SB <= T
    assert (E - B) - D >= 0 and (E - B) + D + SE <= SB
    assert E + SE <= T and OFF + NP <= T and SE >= NP
    return dict(Hp=Hp, Wp=Wp, NP=NP, D=D, R=R, OFF=OFF,
                A=A, SA=SA, B=B, SB=SB, E=E, SE=SE, T=T)


# ------------------------------ Pallas kernel ------------------------------- #

def _make_kernel(HW, lay):
    Wp = lay["Wp"]
    A, SA = lay["A"], lay["SA"]
    B, SB = lay["B"], lay["SB"]
    E, SE = lay["E"], lay["SE"]
    gBA = B - A          # h1-slab offset of the h1p slab
    gEB = E - B          # h1p-slab offset of the output slab
    inv_hw = 1.0 / float(HW)

    def conv9(src, w9, base, width):
        # 3x3 conv as 9 shifted lane-slices x (C,C) matmuls, f32 accumulation on MXU.
        acc = None
        for ky in range(3):
            for kx in range(3):
                k = ky * 3 + kx
                d = (ky - 1) * Wp + (kx - 1)
                sl = src[:, base + d: base + d + width]
                t = jnp.dot(w9[k], sl, preferred_element_type=jnp.float32)
                acc = t if acc is None else acc + t
        return acc

    def inorm(y, m):
        # one-pass masked stats (junk lanes outside the image are zeroed by m)
        ym = y * m
        s = jnp.sum(ym, axis=1, keepdims=True)
        ss = jnp.sum(ym * y, axis=1, keepdims=True)
        mean = s * inv_hw
        var = ss * inv_hw - mean * mean          # biased variance (PyTorch IN)
        return (y - mean) * jax.lax.rsqrt(var + EPS)

    def kernel(xp_ref, m_ref, w1_ref, b1_ref, w2_ref, b2_ref, o_ref):
        x = xp_ref[0]                            # (C, T)   f32, padded x in buffer coords
        m = m_ref[...]                           # (8, T)   f32 masks (interior / refl. rows-cols)
        w1 = w1_ref[...]                         # (9, C, C) bf16
        w2 = w2_ref[...]
        b1 = b1_ref[...]                         # (C, 1)   f32
        b2 = b2_ref[...]

        xbf = x.astype(jnp.bfloat16)

        # ---- stage 1: conv3x3 + bias + InstanceNorm + ReLU (slab base A) ----
        y1 = conv9(xbf, w1, A, SA) + b1
        h1 = jnp.maximum(inorm(y1, m[0:1, A:A + SA]), 0.0)        # (C, SA) f32

        # ---- in-kernel reflection pad of h1 -> h1p slab (base B) ----
        def colfix_at(s):
            # value of the column-reflection-fixed h1 at buffer position (B + j + s)
            c = h1[:, gBA + s:     gBA + s + SB]
            cp = h1[:, gBA + s + 2: gBA + s + 2 + SB]
            cm = h1[:, gBA + s - 2: gBA + s - 2 + SB]
            mc0 = m[1:2, B + s: B + s + SB]       # padded col 0  -> col 2
            mcL = m[2:3, B + s: B + s + SB]       # padded col -1 -> col Wp-3
            return mc0 * cp + mcL * cm + (1.0 - mc0 - mcL) * c

        cf0 = colfix_at(0)
        cfd = colfix_at(2 * Wp)                   # row 0    <- row 2 (already col-fixed)
        cfu = colfix_at(-2 * Wp)                  # row Hp-1 <- row Hp-3
        mr0 = m[3:4, B:B + SB]
        mrL = m[4:5, B:B + SB]
        h1p = (mr0 * cfd + mrL * cfu + (1.0 - mr0 - mrL) * cf0).astype(jnp.bfloat16)

        # ---- stage 2: conv3x3 + bias + InstanceNorm + residual (slab base E) ----
        y2 = conv9(h1p, w2, gEB, SE) + b2
        h2 = inorm(y2, m[0:1, E:E + SE])
        o_ref[0] = (x[:, E:E + SE] + h2).astype(o_ref.dtype)

    return kernel


# --------------------------------- wrapper ---------------------------------- #

def residual_block(x, w1, b1, w2, b2):
    """ResidualBlock.forward(x).  x: (N, C, H, W) float32 -> same shape."""
    N, C, H, W = x.shape
    lay = _layout(H, W)
    Hp, Wp, NP = lay["Hp"], lay["Wp"], lay["NP"]
    OFF, T, SE = lay["OFF"], lay["T"], lay["SE"]

    # host glue: reflection-pad x, flatten, embed at OFF inside a lane-dense buffer
    xpad = jnp.pad(x.astype(jnp.float32), ((0, 0), (0, 0), (1, 1), (1, 1)), mode="reflect")
    xbuf = jnp.pad(xpad.reshape(N, C, NP), ((0, 0), (0, 0), (OFF, T - OFF - NP)))

    # static masks in buffer coordinates (row 0: interior, 1-4: reflection borders)
    p = np.arange(NP)
    hp, wp = p // Wp, p % Wp
    mk = np.zeros((8, T), np.float32)
    mk[0, OFF:OFF + NP] = (hp >= 1) & (hp <= H) & (wp >= 1) & (wp <= W)
    mk[1, OFF:OFF + NP] = (wp == 0)
    mk[2, OFF:OFF + NP] = (wp == Wp - 1)
    mk[3, OFF:OFF + NP] = (hp == 0)
    mk[4, OFF:OFF + NP] = (hp == Hp - 1)
    masks = jnp.asarray(mk)

    # per-tap conv weights, pre-cast to bf16 for the MXU
    w1t = jnp.transpose(w1, (2, 3, 0, 1)).reshape(9, C, C).astype(jnp.bfloat16)
    w2t = jnp.transpose(w2, (2, 3, 0, 1)).reshape(9, C, C).astype(jnp.bfloat16)
    b1c = b1.reshape(C, 1).astype(jnp.float32)
    b2c = b2.reshape(C, 1).astype(jnp.float32)

    kernel = _make_kernel(H * W, lay)

    flops = int(N * 2 * 2 * C * C * 9 * H * W)
    bytes_accessed = int((xbuf.size + masks.size + b1c.size + b2c.size) * 4
                         + (w1t.size + w2t.size) * 2 + N * C * SE * 4)

    out_wide = pl.pallas_call(
        kernel,
        out_shape=jax.ShapeDtypeStruct((N, C, SE), jnp.float32),
        grid_spec=pltpu.PrefetchScalarGridSpec(
            num_scalar_prefetch=0,
            grid=(N,),
            in_specs=[
                pl.BlockSpec((1, C, T), lambda n: (n, 0, 0)),   # padded x buffer
                pl.BlockSpec((8, T), lambda n: (0, 0)),         # static masks
                pl.BlockSpec((9, C, C), lambda n: (0, 0, 0)),   # conv1 weights (bf16)
                pl.BlockSpec((C, 1), lambda n: (0, 0)),         # conv1 bias
                pl.BlockSpec((9, C, C), lambda n: (0, 0, 0)),   # conv2 weights (bf16)
                pl.BlockSpec((C, 1), lambda n: (0, 0)),         # conv2 bias
            ],
            out_specs=pl.BlockSpec((1, C, SE), lambda n: (n, 0, 0)),
        ),
        compiler_params=pltpu.CompilerParams(
            dimension_semantics=("parallel",),
            vmem_limit_bytes=32 * 1024 * 1024,
        ),
        cost_estimate=pl.CostEstimate(
            flops=flops, transcendentals=2 * N * C, bytes_accessed=bytes_accessed),
    )(xbuf, masks, w1t, b1c, w2t, b2c)

    # host glue: drop the padded border / junk lanes to recover NCHW
    out_pad = out_wide[:, :, :NP].reshape(N, C, Hp, Wp)
    return out_pad[:, :, 1:H + 1, 1:W + 1]


# ---------------------------- pure-JAX reference ---------------------------- #

def _reference(x, w1, b1, w2, b2):
    def conv(z, w, b):
        zpad = jnp.pad(z, ((0, 0), (0, 0), (1, 1), (1, 1)), mode="reflect")
        y = jax.lax.conv_general_dilated(
            zpad, w, (1, 1), "VALID", dimension_numbers=("NCHW", "OIHW", "NCHW"))
        return y + b[None, :, None, None]

    def inorm(y):
        mean = y.mean(axis=(2, 3), keepdims=True)
        var = ((y - mean) ** 2).mean(axis=(2, 3), keepdims=True)
        return (y - mean) / jnp.sqrt(var + EPS)

    h = jnp.maximum(inorm(conv(x, w1, b1)), 0.0)
    h = inorm(conv(h, w2, b2))
    return x + h


# ----------------------------------- main ----------------------------------- #

if __name__ == "__main__":
    N, C, H, W = 2, 4, 16, 16
    key = jax.random.PRNGKey(0)
    kx_, kw1, kb1, kw2, kb2 = jax.random.split(key, 5)

    x = jax.random.normal(kx_, (N, C, H, W), jnp.float32)
    # Deterministic synthetic parameters (shapes from nn.Conv2d(C, C, 3)).
    w1 = jax.random.normal(kw1, (C, C, 3, 3), jnp.float32) * 0.2
    b1 = jax.random.normal(kb1, (C,), jnp.float32) * 0.1
    w2 = jax.random.normal(kw2, (C, C, 3, 3), jnp.float32) * 0.2
    b2 = jax.random.normal(kb2, (C,), jnp.float32) * 0.1

    fn = jax.jit(residual_block)
    out = jax.block_until_ready(fn(x, w1, b1, w2, b2))

    ref = _reference(x, w1, b1, w2, b2)
    assert out.shape == x.shape and out.dtype == x.dtype
    max_err = float(jnp.max(jnp.abs(out - ref)))
    # bf16 matmuls with f32 accumulation / f32 InstanceNorm: small expected error.
    assert max_err < 8e-2, f"mismatch vs reference: {max_err}"

    print("KERNEL_OK")
</pallas_src>

<mosaic_0001>
module attributes {stable_mosaic.version = 11 : i64} {
  func.func @kernel(%arg0: i32, %arg1: memref<1x4x640xf32, #tpu.memory_space<vmem>>, %arg2: memref<8x640xf32, #tpu.memory_space<vmem>>, %arg3: memref<9x4x4xbf16, #tpu.memory_space<vmem>>, %arg4: memref<4x1xf32, #tpu.memory_space<vmem>>, %arg5: memref<9x4x4xbf16, #tpu.memory_space<vmem>>, %arg6: memref<4x1xf32, #tpu.memory_space<vmem>>, %arg7: memref<1x4x384xf32, #tpu.memory_space<vmem>>) attributes {dimension_semantics = [#tpu.dimension_semantics<parallel>], iteration_bounds = array<i64: 2>, scalar_prefetch = 0 : i64, scratch_operands = 0 : i64, tpu.core_type = #tpu.core_type<tc>, window_params = [{transform_indices = @transform_0, window_bounds = array<i64: 1, 4, 640>}, {pipeline_mode = #tpu.pipeline_mode<synchronous>, transform_indices = @transform_1, window_bounds = array<i64: 8, 640>}, {pipeline_mode = #tpu.pipeline_mode<synchronous>, transform_indices = @transform_2, window_bounds = array<i64: 9, 4, 4>}, {pipeline_mode = #tpu.pipeline_mode<synchronous>, transform_indices = @transform_3, window_bounds = array<i64: 4, 1>}, {pipeline_mode = #tpu.pipeline_mode<synchronous>, transform_indices = @transform_4, window_bounds = array<i64: 9, 4, 4>}, {pipeline_mode = #tpu.pipeline_mode<synchronous>, transform_indices = @transform_5, window_bounds = array<i64: 4, 1>}, {transform_indices = @transform_6, window_bounds = array<i64: 1, 4, 384>}]} {
    %c0 = arith.constant 0 : index
    %c0_0 = arith.constant 0 : index
    %c0_1 = arith.constant 0 : index
    %0 = vector.load %arg1[%c0, %c0_0, %c0_1] : memref<1x4x640xf32, #tpu.memory_space<vmem>>, vector<1x4x640xf32>
    %1 = vector.shape_cast %0 : vector<1x4x640xf32> to vector<4x640xf32>
    %c0_2 = arith.constant 0 : index
    %c0_3 = arith.constant 0 : index
    %2 = vector.load %arg2[%c0_2, %c0_3] : memref<8x640xf32, #tpu.memory_space<vmem>>, vector<8x640xf32>
    %c0_4 = arith.constant 0 : index
    %c0_5 = arith.constant 0 : index
    %c0_6 = arith.constant 0 : index
    %3 = vector.load %arg3[%c0_4, %c0_5, %c0_6] : memref<9x4x4xbf16, #tpu.memory_space<vmem>>, vector<9x4x4xbf16>
    %c0_7 = arith.constant 0 : index
    %c0_8 = arith.constant 0 : index
    %c0_9 = arith.constant 0 : index
    %4 = vector.load %arg5[%c0_7, %c0_8, %c0_9] : memref<9x4x4xbf16, #tpu.memory_space<vmem>>, vector<9x4x4xbf16>
    %c0_10 = arith.constant 0 : index
    %c0_11 = arith.constant 0 : index
    %5 = vector.load %arg4[%c0_10, %c0_11] : memref<4x1xf32, #tpu.memory_space<vmem>>, vector<4x1xf32>
    %c0_12 = arith.constant 0 : index
    %c0_13 = arith.constant 0 : index
    %6 = vector.load %arg6[%c0_12, %c0_13] : memref<4x1xf32, #tpu.memory_space<vmem>>, vector<4x1xf32>
    %7 = arith.truncf %1 : vector<4x640xf32> to vector<4x640xbf16>
    %8 = vector.extract_strided_slice %7 {offsets = [0, 52], sizes = [4, 498], strides = [1, 1]} : vector<4x640xbf16> to vector<4x498xbf16>
    %9 = vector.extract_strided_slice %3 {offsets = [0, 0, 0], sizes = [1, 4, 4], strides = [1, 1, 1]} : vector<9x4x4xbf16> to vector<1x4x4xbf16>
    %10 = vector.shape_cast %9 : vector<1x4x4xbf16> to vector<4x4xbf16>
    %cst = arith.constant dense<0.000000e+00> : vector<4x498xf32>
    %11 = tpu.matmul %10, %8, %cst {dimension_numbers = #tpu.dot_dimension_numbers<[1], [0], [0], [1], [0, 0, 1, 1], [], []>} : vector<4x4xbf16>, vector<4x498xbf16>, vector<4x498xf32> -> vector<4x498xf32>
    %12 = vector.extract_strided_slice %7 {offsets = [0, 53], sizes = [4, 498], strides = [1, 1]} : vector<4x640xbf16> to vector<4x498xbf16>
    %13 = vector.extract_strided_slice %3 {offsets = [1, 0, 0], sizes = [1, 4, 4], strides = [1, 1, 1]} : vector<9x4x4xbf16> to vector<1x4x4xbf16>
    %14 = vector.shape_cast %13 : vector<1x4x4xbf16> to vector<4x4xbf16>
    %cst_14 = arith.constant dense<0.000000e+00> : vector<4x498xf32>
    %15 = tpu.matmul %14, %12, %cst_14 {dimension_numbers = #tpu.dot_dimension_numbers<[1], [0], [0], [1], [0, 0, 1, 1], [], []>} : vector<4x4xbf16>, vector<4x498xbf16>, vector<4x498xf32> -> vector<4x498xf32>
    %16 = arith.addf %11, %15 : vector<4x498xf32>
    %17 = vector.extract_strided_slice %7 {offsets = [0, 54], sizes = [4, 498], strides = [1, 1]} : vector<4x640xbf16> to vector<4x498xbf16>
    %18 = vector.extract_strided_slice %3 {offsets = [2, 0, 0], sizes = [1, 4, 4], strides = [1, 1, 1]} : vector<9x4x4xbf16> to vector<1x4x4xbf16>
    %19 = vector.shape_cast %18 : vector<1x4x4xbf16> to vector<4x4xbf16>
    %cst_15 = arith.constant dense<0.000000e+00> : vector<4x498xf32>
    %20 = tpu.matmul %19, %17, %cst_15 {dimension_numbers = #tpu.dot_dimension_numbers<[1], [0], [0], [1], [0, 0, 1, 1], [], []>} : vector<4x4xbf16>, vector<4x498xbf16>, vector<4x498xf32> -> vector<4x498xf32>
    %21 = arith.addf %16, %20 : vector<4x498xf32>
    %22 = vector.extract_strided_slice %7 {offsets = [0, 70], sizes = [4, 498], strides = [1, 1]} : vector<4x640xbf16> to vector<4x498xbf16>
    %23 = vector.extract_strided_slice %3 {offsets = [3, 0, 0], sizes = [1, 4, 4], strides = [1, 1, 1]} : vector<9x4x4xbf16> to vector<1x4x4xbf16>
    %24 = vector.shape_cast %23 : vector<1x4x4xbf16> to vector<4x4xbf16>
    %cst_16 = arith.constant dense<0.000000e+00> : vector<4x498xf32>
    %25 = tpu.matmul %24, %22, %cst_16 {dimension_numbers = #tpu.dot_dimension_numbers<[1], [0], [0], [1], [0, 0, 1, 1], [], []>} : vector<4x4xbf16>, vector<4x498xbf16>, vector<4x498xf32> -> vector<4x498xf32>
    %26 = arith.addf %21, %25 : vector<4x498xf32>
    %27 = vector.extract_strided_slice %7 {offsets = [0, 71], sizes = [4, 498], strides = [1, 1]} : vector<4x640xbf16> to vector<4x498xbf16>
    %28 = vector.extract_strided_slice %3 {offsets = [4, 0, 0], sizes = [1, 4, 4], strides = [1, 1, 1]} : vector<9x4x4xbf16> to vector<1x4x4xbf16>
    %29 = vector.shape_cast %28 : vector<1x4x4xbf16> to vector<4x4xbf16>
    %cst_17 = arith.constant dense<0.000000e+00> : vector<4x498xf32>
    %30 = tpu.matmul %29, %27, %cst_17 {dimension_numbers = #tpu.dot_dimension_numbers<[1], [0], [0], [1], [0, 0, 1, 1], [], []>} : vector<4x4xbf16>, vector<4x498xbf16>, vector<4x498xf32> -> vector<4x498xf32>
    %31 = arith.addf %26, %30 : vector<4x498xf32>
    %32 = vector.extract_strided_slice %7 {offsets = [0, 72], sizes = [4, 498], strides = [1, 1]} : vector<4x640xbf16> to vector<4x498xbf16>
    %33 = vector.extract_strided_slice %3 {offsets = [5, 0, 0], sizes = [1, 4, 4], strides = [1, 1, 1]} : vector<9x4x4xbf16> to vector<1x4x4xbf16>
    %34 = vector.shape_cast %33 : vector<1x4x4xbf16> to vector<4x4xbf16>
    %cst_18 = arith.constant dense<0.000000e+00> : vector<4x498xf32>
    %35 = tpu.matmul %34, %32, %cst_18 {dimension_numbers = #tpu.dot_dimension_numbers<[1], [0], [0], [1], [0, 0, 1, 1], [], []>} : vector<4x4xbf16>, vector<4x498xbf16>, vector<4x498xf32> -> vector<4x498xf32>
    %36 = arith.addf %31, %35 : vector<4x498xf32>
    %37 = vector.extract_strided_slice %7 {offsets = [0, 88], sizes = [4, 498], strides = [1, 1]} : vector<4x640xbf16> to vector<4x498xbf16>
    %38 = vector.extract_strided_slice %3 {offsets = [6, 0, 0], sizes = [1, 4, 4], strides = [1, 1, 1]} : vector<9x4x4xbf16> to vector<1x4x4xbf16>
    %39 = vector.shape_cast %38 : vector<1x4x4xbf16> to vector<4x4xbf16>
    %cst_19 = arith.constant dense<0.000000e+00> : vector<4x498xf32>
    %40 = tpu.matmul %39, %37, %cst_19 {dimension_numbers = #tpu.dot_dimension_numbers<[1], [0], [0], [1], [0, 0, 1, 1], [], []>} : vector<4x4xbf16>, vector<4x498xbf16>, vector<4x498xf32> -> vector<4x498xf32>
    %41 = arith.addf %36, %40 : vector<4x498xf32>
    %42 = vector.extract_strided_slice %7 {offsets = [0, 89], sizes = [4, 498], strides = [1, 1]} : vector<4x640xbf16> to vector<4x498xbf16>
    %43 = vector.extract_strided_slice %3 {offsets = [7, 0, 0], sizes = [1, 4, 4], strides = [1, 1, 1]} : vector<9x4x4xbf16> to vector<1x4x4xbf16>
    %44 = vector.shape_cast %43 : vector<1x4x4xbf16> to vector<4x4xbf16>
    %cst_20 = arith.constant dense<0.000000e+00> : vector<4x498xf32>
    %45 = tpu.matmul %44, %42, %cst_20 {dimension_numbers = #tpu.dot_dimension_numbers<[1], [0], [0], [1], [0, 0, 1, 1], [], []>} : vector<4x4xbf16>, vector<4x498xbf16>, vector<4x498xf32> -> vector<4x498xf32>
    %46 = arith.addf %41, %45 : vector<4x498xf32>
    %47 = vector.extract_strided_slice %7 {offsets = [0, 90], sizes = [4, 498], strides = [1, 1]} : vector<4x640xbf16> to vector<4x498xbf16>
    %48 = vector.extract_strided_slice %3 {offsets = [8, 0, 0], sizes = [1, 4, 4], strides = [1, 1, 1]} : vector<9x4x4xbf16> to vector<1x4x4xbf16>
    %49 = vector.shape_cast %48 : vector<1x4x4xbf16> to vector<4x4xbf16>
    %cst_21 = arith.constant dense<0.000000e+00> : vector<4x498xf32>
    %50 = tpu.matmul %49, %47, %cst_21 {dimension_numbers = #tpu.dot_dimension_numbers<[1], [0], [0], [1], [0, 0, 1, 1], [], []>} : vector<4x4xbf16>, vector<4x498xbf16>, vector<4x498xf32> -> vector<4x498xf32>
    %51 = arith.addf %46, %50 : vector<4x498xf32>
    %52 = vector.broadcast %5 : vector<4x1xf32> to vector<4x498xf32>
    %53 = arith.addf %51, %52 : vector<4x498xf32>
    %54 = vector.extract_strided_slice %2 {offsets = [0, 71], sizes = [1, 498], strides = [1, 1]} : vector<8x640xf32> to vector<1x498xf32>
    %55 = vector.broadcast %54 : vector<1x498xf32> to vector<4x498xf32>
    %56 = arith.mulf %53, %55 : vector<4x498xf32>
    %cst_22 = arith.constant dense<0.000000e+00> : vector<4xf32>
    %57 = vector.multi_reduction <add>, %56, %cst_22 [1] : vector<4x498xf32> to vector<4xf32>
    %58 = vector.shape_cast %57 : vector<4xf32> to vector<4x1xf32>
    %59 = arith.mulf %56, %53 : vector<4x498xf32>
    %cst_23 = arith.constant dense<0.000000e+00> : vector<4xf32>
    %60 = vector.multi_reduction <add>, %59, %cst_23 [1] : vector<4x498xf32> to vector<4xf32>
    %61 = vector.shape_cast %60 : vector<4xf32> to vector<4x1xf32>
    %cst_24 = arith.constant 3.906250e-03 : f32
    %62 = vector.broadcast %cst_24 : f32 to vector<4x1xf32>
    %63 = arith.mulf %58, %62 : vector<4x1xf32>
    %cst_25 = arith.constant 3.906250e-03 : f32
    %64 = vector.broadcast %cst_25 : f32 to vector<4x1xf32>
    %65 = arith.mulf %61, %64 : vector<4x1xf32>
    %66 = arith.mulf %63, %63 : vector<4x1xf32>
    %67 = arith.subf %65, %66 : vector<4x1xf32>
    %68 = vector.broadcast %63 : vector<4x1xf32> to vector<4x498xf32>
    %69 = arith.subf %53, %68 : vector<4x498xf32>
    %cst_26 = arith.constant 9.99999974E-6 : f32
    %70 = vector.broadcast %cst_26 : f32 to vector<4x1xf32>
    %71 = arith.addf %67, %70 : vector<4x1xf32>
    %72 = math.rsqrt %71 : vector<4x1xf32>
    %73 = vector.broadcast %72 : vector<4x1xf32> to vector<4x498xf32>
    %74 = arith.mulf %69, %73 : vector<4x498xf32>
    %cst_27 = arith.constant 0.000000e+00 : f32
    %75 = vector.broadcast %cst_27 : f32 to vector<4x498xf32>
    %76 = arith.maximumf %74, %75 : vector<4x498xf32>
    %77 = vector.extract_strided_slice %76 {offsets = [0, 38], sizes = [4, 422], strides = [1, 1]} : vector<4x498xf32> to vector<4x422xf32>
    %78 = vector.extract_strided_slice %76 {offsets = [0, 40], sizes = [4, 422], strides = [1, 1]} : vector<4x498xf32> to vector<4x422xf32>
    %79 = vector.extract_strided_slice %76 {offsets = [0, 36], sizes = [4, 422], strides = [1, 1]} : vector<4x498xf32> to vector<4x422xf32>
    %80 = vector.extract_strided_slice %2 {offsets = [1, 109], sizes = [1, 422], strides = [1, 1]} : vector<8x640xf32> to vector<1x422xf32>
    %81 = vector.extract_strided_slice %2 {offsets = [2, 109], sizes = [1, 422], strides = [1, 1]} : vector<8x640xf32> to vector<1x422xf32>
    %82 = vector.broadcast %80 : vector<1x422xf32> to vector<4x422xf32>
    %83 = arith.mulf %82, %78 : vector<4x422xf32>
    %84 = vector.broadcast %81 : vector<1x422xf32> to vector<4x422xf32>
    %85 = arith.mulf %84, %79 : vector<4x422xf32>
    %86 = arith.addf %83, %85 : vector<4x422xf32>
    %cst_28 = arith.constant 1.000000e+00 : f32
    %87 = vector.broadcast %cst_28 : f32 to vector<1x422xf32>
    %88 = arith.subf %87, %80 : vector<1x422xf32>
    %89 = arith.subf %88, %81 : vector<1x422xf32>
    %90 = vector.broadcast %89 : vector<1x422xf32> to vector<4x422xf32>
    %91 = arith.mulf %90, %77 : vector<4x422xf32>
    %92 = arith.addf %86, %91 : vector<4x422xf32>
    %93 = vector.extract_strided_slice %76 {offsets = [0, 74], sizes = [4, 422], strides = [1, 1]} : vector<4x498xf32> to vector<4x422xf32>
    %94 = vector.extract_strided_slice %76 {offsets = [0, 76], sizes = [4, 422], strides = [1, 1]} : vector<4x498xf32> to vector<4x422xf32>
    %95 = vector.extract_strided_slice %76 {offsets = [0, 72], sizes = [4, 422], strides = [1, 1]} : vector<4x498xf32> to vector<4x422xf32>
    %96 = vector.extract_strided_slice %2 {offsets = [1, 145], sizes = [1, 422], strides = [1, 1]} : vector<8x640xf32> to vector<1x422xf32>
    %97 = vector.extract_strided_slice %2 {offsets = [2, 145], sizes = [1, 422], strides = [1, 1]} : vector<8x640xf32> to vector<1x422xf32>
    %98 = vector.broadcast %96 : vector<1x422xf32> to vector<4x422xf32>
    %99 = arith.mulf %98, %94 : vector<4x422xf32>
    %100 = vector.broadcast %97 : vector<1x422xf32> to vector<4x422xf32>
    %101 = arith.mulf %100, %95 : vector<4x422xf32>
    %102 = arith.addf %99, %101 : vector<4x422xf32>
    %cst_29 = arith.constant 1.000000e+00 : f32
    %103 = vector.broadcast %cst_29 : f32 to vector<1x422xf32>
    %104 = arith.subf %103, %96 : vector<1x422xf32>
    %105 = arith.subf %104, %97 : vector<1x422xf32>
    %106 = vector.broadcast %105 : vector<1x422xf32> to vector<4x422xf32>
    %107 = arith.mulf %106, %93 : vector<4x422xf32>
    %108 = arith.addf %102, %107 : vector<4x422xf32>
    %109 = vector.extract_strided_slice %76 {offsets = [0, 2], sizes = [4, 422], strides = [1, 1]} : vector<4x498xf32> to vector<4x422xf32>
    %110 = vector.extract_strided_slice %76 {offsets = [0, 4], sizes = [4, 422], strides = [1, 1]} : vector<4x498xf32> to vector<4x422xf32>
    %111 = vector.extract_strided_slice %76 {offsets = [0, 0], sizes = [4, 422], strides = [1, 1]} : vector<4x498xf32> to vector<4x422xf32>
    %112 = vector.extract_strided_slice %2 {offsets = [1, 73], sizes = [1, 422], strides = [1, 1]} : vector<8x640xf32> to vector<1x422xf32>
    %113 = vector.extract_strided_slice %2 {offsets = [2, 73], sizes = [1, 422], strides = [1, 1]} : vector<8x640xf32> to vector<1x422xf32>
    %114 = vector.broadcast %112 : vector<1x422xf32> to vector<4x422xf32>
    %115 = arith.mulf %114, %110 : vector<4x422xf32>
    %116 = vector.broadcast %113 : vector<1x422xf32> to vector<4x422xf32>
    %117 = arith.mulf %116, %111 : vector<4x422xf32>
    %118 = arith.addf %115, %117 : vector<4x422xf32>
    %cst_30 = arith.constant 1.000000e+00 : f32
    %119 = vector.broadcast %cst_30 : f32 to vector<1x422xf32>
    %120 = arith.subf %119, %112 : vector<1x422xf32>
    %121 = arith.subf %120, %113 : vector<1x422xf32>
    %122 = vector.broadcast %121 : vector<1x422xf32> to vector<4x422xf32>
    %123 = arith.mulf %122, %109 : vector<4x422xf32>
    %124 = arith.addf %118, %123 : vector<4x422xf32>
    %125 = vector.extract_strided_slice %2 {offsets = [3, 109], sizes = [1, 422], strides = [1, 1]} : vector<8x640xf32> to vector<1x422xf32>
    %126 = vector.extract_strided_slice %2 {offsets = [4, 109], sizes = [1, 422], strides = [1, 1]} : vector<8x640xf32> to vector<1x422xf32>
    %127 = vector.broadcast %125 : vector<1x422xf32> to vector<4x422xf32>
    %128 = arith.mulf %127, %108 : vector<4x422xf32>
    %129 = vector.broadcast %126 : vector<1x422xf32> to vector<4x422xf32>
    %130 = arith.mulf %129, %124 : vector<4x422xf32>
    %131 = arith.addf %128, %130 : vector<4x422xf32>
    %cst_31 = arith.constant 1.000000e+00 : f32
    %132 = vector.broadcast %cst_31 : f32 to vector<1x422xf32>
    %133 = arith.subf %132, %125 : vector<1x422xf32>
    %134 = arith.subf %133, %126 : vector<1x422xf32>
    %135 = vector.broadcast %134 : vector<1x422xf32> to vector<4x422xf32>
    %136 = arith.mulf %135, %92 : vector<4x422xf32>
    %137 = arith.addf %131, %136 : vector<4x422xf32>
    %138 = arith.truncf %137 : vector<4x422xf32> to vector<4x422xbf16>
    %139 = vector.extract_strided_slice %138 {offsets = [0, 0], sizes = [4, 384], strides = [1, 1]} : vector<4x422xbf16> to vector<4x384xbf16>
    %140 = vector.extract_strided_slice %4 {offsets = [0, 0, 0], sizes = [1, 4, 4], strides = [1, 1, 1]} : vector<9x4x4xbf16> to vector<1x4x4xbf16>
    %141 = vector.shape_cast %140 : vector<1x4x4xbf16> to vector<4x4xbf16>
    %cst_32 = arith.constant dense<0.000000e+00> : vector<4x384xf32>
    %142 = tpu.matmul %141, %139, %cst_32 {dimension_numbers = #tpu.dot_dimension_numbers<[1], [0], [0], [1], [0, 0, 1, 1], [], []>} : vector<4x4xbf16>, vector<4x384xbf16>, vector<4x384xf32> -> vector<4x384xf32>
    %143 = vector.extract_strided_slice %138 {offsets = [0, 1], sizes = [4, 384], strides = [1, 1]} : vector<4x422xbf16> to vector<4x384xbf16>
    %144 = vector.extract_strided_slice %4 {offsets = [1, 0, 0], sizes = [1, 4, 4], strides = [1, 1, 1]} : vector<9x4x4xbf16> to vector<1x4x4xbf16>
    %145 = vector.shape_cast %144 : vector<1x4x4xbf16> to vector<4x4xbf16>
    %cst_33 = arith.constant dense<0.000000e+00> : vector<4x384xf32>
    %146 = tpu.matmul %145, %143, %cst_33 {dimension_numbers = #tpu.dot_dimension_numbers<[1], [0], [0], [1], [0, 0, 1, 1], [], []>} : vector<4x4xbf16>, vector<4x384xbf16>, vector<4x384xf32> -> vector<4x384xf32>
    %147 = arith.addf %142, %146 : vector<4x384xf32>
    %148 = vector.extract_strided_slice %138 {offsets = [0, 2], sizes = [4, 384], strides = [1, 1]} : vector<4x422xbf16> to vector<4x384xbf16>
    %149 = vector.extract_strided_slice %4 {offsets = [2, 0, 0], sizes = [1, 4, 4], strides = [1, 1, 1]} : vector<9x4x4xbf16> to vector<1x4x4xbf16>
    %150 = vector.shape_cast %149 : vector<1x4x4xbf16> to vector<4x4xbf16>
    %cst_34 = arith.constant dense<0.000000e+00> : vector<4x384xf32>
    %151 = tpu.matmul %150, %148, %cst_34 {dimension_numbers = #tpu.dot_dimension_numbers<[1], [0], [0], [1], [0, 0, 1, 1], [], []>} : vector<4x4xbf16>, vector<4x384xbf16>, vector<4x384xf32> -> vector<4x384xf32>
    %152 = arith.addf %147, %151 : vector<4x384xf32>
    %153 = vector.extract_strided_slice %138 {offsets = [0, 18], sizes = [4, 384], strides = [1, 1]} : vector<4x422xbf16> to vector<4x384xbf16>
    %154 = vector.extract_strided_slice %4 {offsets = [3, 0, 0], sizes = [1, 4, 4], strides = [1, 1, 1]} : vector<9x4x4xbf16> to vector<1x4x4xbf16>
    %155 = vector.shape_cast %154 : vector<1x4x4xbf16> to vector<4x4xbf16>
    %cst_35 = arith.constant dense<0.000000e+00> : vector<4x384xf32>
    %156 = tpu.matmul %155, %153, %cst_35 {dimension_numbers = #tpu.dot_dimension_numbers<[1], [0], [0], [1], [0, 0, 1, 1], [], []>} : vector<4x4xbf16>, vector<4x384xbf16>, vector<4x384xf32> -> vector<4x384xf32>
    %157 = arith.addf %152, %156 : vector<4x384xf32>
    %158 = vector.extract_strided_slice %138 {offsets = [0, 19], sizes = [4, 384], strides = [1, 1]} : vector<4x422xbf16> to vector<4x384xbf16>
    %159 = vector.extract_strided_slice %4 {offsets = [4, 0, 0], sizes = [1, 4, 4], strides = [1, 1, 1]} : vector<9x4x4xbf16> to vector<1x4x4xbf16>
    %160 = vector.shape_cast %159 : vector<1x4x4xbf16> to vector<4x4xbf16>
    %cst_36 = arith.constant dense<0.000000e+00> : vector<4x384xf32>
    %161 = tpu.matmul %160, %158, %cst_36 {dimension_numbers = #tpu.dot_dimension_numbers<[1], [0], [0], [1], [0, 0, 1, 1], [], []>} : vector<4x4xbf16>, vector<4x384xbf16>, vector<4x384xf32> -> vector<4x384xf32>
    %162 = arith.addf %157, %161 : vector<4x384xf32>
    %163 = vector.extract_strided_slice %138 {offsets = [0, 20], sizes = [4, 384], strides = [1, 1]} : vector<4x422xbf16> to vector<4x384xbf16>
    %164 = vector.extract_strided_slice %4 {offsets = [5, 0, 0], sizes = [1, 4, 4], strides = [1, 1, 1]} : vector<9x4x4xbf16> to vector<1x4x4xbf16>
    %165 = vector.shape_cast %164 : vector<1x4x4xbf16> to vector<4x4xbf16>
    %cst_37 = arith.constant dense<0.000000e+00> : vector<4x384xf32>
    %166 = tpu.matmul %165, %163, %cst_37 {dimension_numbers = #tpu.dot_dimension_numbers<[1], [0], [0], [1], [0, 0, 1, 1], [], []>} : vector<4x4xbf16>, vector<4x384xbf16>, vector<4x384xf32> -> vector<4x384xf32>
    %167 = arith.addf %162, %166 : vector<4x384xf32>
    %168 = vector.extract_strided_slice %138 {offsets = [0, 36], sizes = [4, 384], strides = [1, 1]} : vector<4x422xbf16> to vector<4x384xbf16>
    %169 = vector.extract_strided_slice %4 {offsets = [6, 0, 0], sizes = [1, 4, 4], strides = [1, 1, 1]} : vector<9x4x4xbf16> to vector<1x4x4xbf16>
    %170 = vector.shape_cast %169 : vector<1x4x4xbf16> to vector<4x4xbf16>
    %cst_38 = arith.constant dense<0.000000e+00> : vector<4x384xf32>
    %171 = tpu.matmul %170, %168, %cst_38 {dimension_numbers = #tpu.dot_dimension_numbers<[1], [0], [0], [1], [0, 0, 1, 1], [], []>} : vector<4x4xbf16>, vector<4x384xbf16>, vector<4x384xf32> -> vector<4x384xf32>
    %172 = arith.addf %167, %171 : vector<4x384xf32>
    %173 = vector.extract_strided_slice %138 {offsets = [0, 37], sizes = [4, 384], strides = [1, 1]} : vector<4x422xbf16> to vector<4x384xbf16>
    %174 = vector.extract_strided_slice %4 {offsets = [7, 0, 0], sizes = [1, 4, 4], strides = [1, 1, 1]} : vector<9x4x4xbf16> to vector<1x4x4xbf16>
    %175 = vector.shape_cast %174 : vector<1x4x4xbf16> to vector<4x4xbf16>
    %cst_39 = arith.constant dense<0.000000e+00> : vector<4x384xf32>
    %176 = tpu.matmul %175, %173, %cst_39 {dimension_numbers = #tpu.dot_dimension_numbers<[1], [0], [0], [1], [0, 0, 1, 1], [], []>} : vector<4x4xbf16>, vector<4x384xbf16>, vector<4x384xf32> -> vector<4x384xf32>
    %177 = arith.addf %172, %176 : vector<4x384xf32>
    %178 = vector.extract_strided_slice %138 {offsets = [0, 38], sizes = [4, 384], strides = [1, 1]} : vector<4x422xbf16> to vector<4x384xbf16>
    %179 = vector.extract_strided_slice %4 {offsets = [8, 0, 0], sizes = [1, 4, 4], strides = [1, 1, 1]} : vector<9x4x4xbf16> to vector<1x4x4xbf16>
    %180 = vector.shape_cast %179 : vector<1x4x4xbf16> to vector<4x4xbf16>
    %cst_40 = arith.constant dense<0.000000e+00> : vector<4x384xf32>
    %181 = tpu.matmul %180, %178, %cst_40 {dimension_numbers = #tpu.dot_dimension_numbers<[1], [0], [0], [1], [0, 0, 1, 1], [], []>} : vector<4x4xbf16>, vector<4x384xbf16>, vector<4x384xf32> -> vector<4x384xf32>
    %182 = arith.addf %177, %181 : vector<4x384xf32>
    %183 = vector.broadcast %6 : vector<4x1xf32> to vector<4x384xf32>
    %184 = arith.addf %182, %183 : vector<4x384xf32>
    %185 = vector.extract_strided_slice %2 {offsets = [0, 128], sizes = [1, 384], strides = [1, 1]} : vector<8x640xf32> to vector<1x384xf32>
    %186 = vector.broadcast %185 : vector<1x384xf32> to vector<4x384xf32>
    %187 = arith.mulf %184, %186 : vector<4x384xf32>
    %cst_41 = arith.constant dense<0.000000e+00> : vector<4xf32>
    %188 = vector.multi_reduction <add>, %187, %cst_41 [1] : vector<4x384xf32> to vector<4xf32>
    %189 = vector.shape_cast %188 : vector<4xf32> to vector<4x1xf32>
    %190 = arith.mulf %187, %184 : vector<4x384xf32>
    %cst_42 = arith.constant dense<0.000000e+00> : vector<4xf32>
    %191 = vector.multi_reduction <add>, %190, %cst_42 [1] : vector<4x384xf32> to vector<4xf32>
    %192 = vector.shape_cast %191 : vector<4xf32> to vector<4x1xf32>
    %cst_43 = arith.constant 3.906250e-03 : f32
    %193 = vector.broadcast %cst_43 : f32 to vector<4x1xf32>
    %194 = arith.mulf %189, %193 : vector<4x1xf32>
    %cst_44 = arith.constant 3.906250e-03 : f32
    %195 = vector.broadcast %cst_44 : f32 to vector<4x1xf32>
    %196 = arith.mulf %192, %195 : vector<4x1xf32>
    %197 = arith.mulf %194, %194 : vector<4x1xf32>
    %198 = arith.subf %196, %197 : vector<4x1xf32>
    %199 = vector.broadcast %194 : vector<4x1xf32> to vector<4x384xf32>
    %200 = arith.subf %184, %199 : vector<4x384xf32>
    %cst_45 = arith.constant 9.99999974E-6 : f32
    %201 = vector.broadcast %cst_45 : f32 to vector<4x1xf32>
    %202 = arith.addf %198, %201 : vector<4x1xf32>
    %203 = math.rsqrt %202 : vector<4x1xf32>
    %204 = vector.broadcast %203 : vector<4x1xf32> to vector<4x384xf32>
    %205 = arith.mulf %200, %204 : vector<4x384xf32>
    %206 = vector.extract_strided_slice %1 {offsets = [0, 128], sizes = [4, 384], strides = [1, 1]} : vector<4x640xf32> to vector<4x384xf32>
    %207 = arith.addf %206, %205 : vector<4x384xf32>
    %c0_46 = arith.constant 0 : index
    %c0_47 = arith.constant 0 : index
    %c0_48 = arith.constant 0 : index
    %208 = vector.load %arg7[%c0_46, %c0_47, %c0_48] : memref<1x4x384xf32, #tpu.memory_space<vmem>>, vector<1x4x384xf32>
    %209 = vector.shape_cast %208 : vector<1x4x384xf32> to vector<4x384xf32>
    %210 = vector.shape_cast %207 : vector<4x384xf32> to vector<1x4x384xf32>
    tpu.vector_store %arg7[%c0_46, %c0_47, %c0_48], %210 {strides = array<i32>} : memref<1x4x384xf32, #tpu.memory_space<vmem>>, vector<1x4x384xf32>,
    return
  }
  func.func @transform_0(%arg0: i32) -> (i32, i32, i32) {
    %c0_i32 = arith.constant 0 : i32
    %c0_i32_0 = arith.constant 0 : i32
    %c0_i32_1 = arith.constant 0 : i32
    return %arg0, %c0_i32, %c0_i32_0 : i32, i32, i32
  }
  func.func @transform_1(%arg0: i32) -> (i32, i32) {
    %c0_i32 = arith.constant 0 : i32
    %c0_i32_0 = arith.constant 0 : i32
    %c0_i32_1 = arith.constant 0 : i32
    return %c0_i32, %c0_i32_0 : i32, i32
  }
  func.func @transform_2(%arg0: i32) -> (i32, i32, i32) {
    %c0_i32 = arith.constant 0 : i32
    %c0_i32_0 = arith.constant 0 : i32
    %c0_i32_1 = arith.constant 0 : i32
    %c0_i32_2 = arith.constant 0 : i32
    return %c0_i32, %c0_i32_0, %c0_i32_1 : i32, i32, i32
  }
  func.func @transform_3(%arg0: i32) -> (i32, i32) {
    %c0_i32 = arith.constant 0 : i32
    %c0_i32_0 = arith.constant 0 : i32
    %c0_i32_1 = arith.constant 0 : i32
    return %c0_i32, %c0_i32_0 : i32, i32
  }
  func.func @transform_4(%arg0: i32) -> (i32, i32, i32) {
    %c0_i32 = arith.constant 0 : i32
    %c0_i32_0 = arith.constant 0 : i32
    %c0_i32_1 = arith.constant 0 : i32
    %c0_i32_2 = arith.constant 0 : i32
    return %c0_i32, %c0_i32_0, %c0_i32_1 : i32, i32, i32
  }
  func.func @transform_5(%arg0: i32) -> (i32, i32) {
    %c0_i32 = arith.constant 0 : i32
    %c0_i32_0 = arith.constant 0 : i32
    %c0_i32_1 = arith.constant 0 : i32
    return %c0_i32, %c0_i32_0 : i32, i32
  }
  func.func @transform_6(%arg0: i32) -> (i32, i32, i32) {
    %c0_i32 = arith.constant 0 : i32
    %c0_i32_0 = arith.constant 0 : i32
    %c0_i32_1 = arith.constant 0 : i32
    return %arg0, %c0_i32, %c0_i32_0 : i32, i32, i32
  }
}

</mosaic_0001>

<llo_original>
// kernel: residual_block.1
$region0: #{residual_block.1}
  #allocation0 [shape = 'u32[]', space=smem, size = 0x4, offset = 0x4, fixed_abs, tag = 'smem constant byte address 0x4 - core index']
  #allocation1 [shape = 'u32[72,128]{1,0:T(1,128)}', space=vmem, size = 0x9000, scoped, tag = 'internal scratch']
  %s0 = inlined_call_operand.vmem [shape: f32[2,4,640], index: 0, kind: input, shape index: {}]
  %s1 = inlined_call_operand.vmem [shape: f32[8,640], index: 1, kind: input, shape index: {}]
  %s2 = inlined_call_operand.vmem [shape: bf16[9,4,4], index: 2, kind: input, shape index: {}]
  %s3 = inlined_call_operand.vmem [shape: f32[4,1], index: 3, kind: input, shape index: {}]
  %s4 = inlined_call_operand.vmem [shape: bf16[9,4,4], index: 4, kind: input, shape index: {}]
  %s5 = inlined_call_operand.vmem [shape: f32[4,1], index: 5, kind: input, shape index: {}]
  %s6 = inlined_call_operand.vmem [shape: f32[2,4,384], index: 6, kind: output, shape index: {}]
  %s7 = sld [smem:[#allocation0]]
  $region57: #{residual_block.1} parent=0
    _
  %s9 = ssub.s32 1, %s7
  %s10 = scalar_select 0, %s9, %s7
  loop: start=0, step=1, limit=4
  $region2: #{residual_block.1} parent=0 // loop_pre_header
    _
  $region3: #{residual_block.1} parent=0 // loop_header
    %s12 = sphi 0, %s16
    %p13 = scmp.ge.s32.totalorder %s12, 4
    %s22 = sphi 0, %s24
    %s25 = sphi 0, %s22
    %s26 = sphi 0, %s25
    %s42 = sphi 0, %s26
    %s46 = sphi 0, %s46
    %s48 = sphi 0, %s46
    %s49 = sphi 0, %s48
    %s63 = sphi 0, %s49
    %s67 = sphi 0, %s67
    %s69 = sphi 0, %s67
    %s70 = sphi 0, %s69
    %s84 = sphi 0, %s70
    %s88 = sphi 0, %s88
    %s90 = sphi 0, %s88
    %s91 = sphi 0, %s90
    %s105 = sphi 0, %s91
    %s109 = sphi 0, %s109
    %s111 = sphi 0, %s109
    %s112 = sphi 0, %s111
    %s126 = sphi 0, %s112
    %s130 = sphi 0, %s130
    %s132 = sphi 0, %s130
    %s133 = sphi 0, %s132
    %s147 = sphi 0, %s133
    %s153 = sphi 0, %s155
    %s156 = sphi 0, %s153
    %s157 = sphi 0, %s156
    %s173 = sphi 0, %s157
  $region4: #{residual_block.1} parent=0 // loop_header_branch
    %15 = sbr.rel (%p13) target = $region8
  $region5: #{residual_block.1} parent=0 // loop_body
    %s17 = ssub.s32 %s12, 1
    %s18 = ssub.s32 %s12, 2
    %s19 = sadd.s32 %s12, 1
    %s20 = ssub.s32 %s12, %s19
    %p21 = scmp.eq.s32.totalorder %s20, 0
    %s23 = sadd.s32 %s22, 1
    %s24 = scalar_select %p21, %s22, %s23
    %p27 = pneg %p21
    %p28 = scmp.eq.s32.totalorder %s12, 1
    %p29 = por %p27, %p28
    %p30 = scmp.ne.s32.totalorder %s22, %s25
    %p31 = scmp.eq.s32.totalorder %s12, 0
    %p32 = por %p30, %p31
    %p33 = scmp.ne.s32.totalorder %s22, %s25
    %p34 = scmp.eq.s32.totalorder %s17, 1
    %p35 = por %p33, %p34
    %p36 = scmp.ne.s32.totalorder %s25, %s26
    %p37 = scmp.eq.s32.totalorder %s17, 0
    %p38 = por %p36, %p37
    %p39 = scmp.ne.s32.totalorder %s25, %s26
    %p40 = scmp.eq.s32.totalorder %s18, 1
    %p41 = por %p39, %p40
    %p43 = scmp.ne.s32.totalorder %s26, %s42
    %p44 = scmp.eq.s32.totalorder %s18, 0
    %p45 = por %p43, %p44
    %s47 = sadd.s32 %s46, 1
    %p50 = scmp.eq.s32.totalorder %s12, 1
    %p51 = scmp.ne.s32.totalorder %s46, %s48
    %p52 = scmp.eq.s32.totalorder %s12, 0
    %p53 = por %p51, %p52
    %p54 = scmp.ne.s32.totalorder %s46, %s48
    %p55 = scmp.eq.s32.totalorder %s17, 1
    %p56 = por %p54, %p55
    %p57 = scmp.ne.s32.totalorder %s48, %s49
    %p58 = scmp.eq.s32.totalorder %s17, 0
    %p59 = por %p57, %p58
    %p60 = scmp.ne.s32.totalorder %s48, %s49
    %p61 = scmp.eq.s32.totalorder %s18, 1
    %p62 = por %p60, %p61
    %p64 = scmp.ne.s32.totalorder %s49, %s63
    %p65 = scmp.eq.s32.totalorder %s18, 0
    %p66 = por %p64, %p65
    %s68 = sadd.s32 %s67, 1
    %p71 = scmp.eq.s32.totalorder %s12, 1
    %p72 = scmp.ne.s32.totalorder %s67, %s69
    %p73 = scmp.eq.s32.totalorder %s12, 0
    %p74 = por %p72, %p73
    %p75 = scmp.ne.s32.totalorder %s67, %s69
    %p76 = scmp.eq.s32.totalorder %s17, 1
    %p77 = por %p75, %p76
    %p78 = scmp.ne.s32.totalorder %s69, %s70
    %p79 = scmp.eq.s32.totalorder %s17, 0
    %p80 = por %p78, %p79
    %p81 = scmp.ne.s32.totalorder %s69, %s70
    %p82 = scmp.eq.s32.totalorder %s18, 1
    %p83 = por %p81, %p82
    %p85 = scmp.ne.s32.totalorder %s70, %s84
    %p86 = scmp.eq.s32.totalorder %s18, 0
    %p87 = por %p85, %p86
    %s89 = sadd.s32 %s88, 1
    %p92 = scmp.eq.s32.totalorder %s12, 1
    %p93 = scmp.ne.s32.totalorder %s88, %s90
    %p94 = scmp.eq.s32.totalorder %s12, 0
    %p95 = por %p93, %p94
    %p96 = scmp.ne.s32.totalorder %s88, %s90
    %p97 = scmp.eq.s32.totalorder %s17, 1
    %p98 = por %p96, %p97
    %p99 = scmp.ne.s32.totalorder %s90, %s91
    %p100 = scmp.eq.s32.totalorder %s17, 0
    %p101 = por %p99, %p100
    %p102 = scmp.ne.s32.totalorder %s90, %s91
    %p103 = scmp.eq.s32.totalorder %s18, 1
    %p104 = por %p102, %p103
    %p106 = scmp.ne.s32.totalorder %s91, %s105
    %p107 = scmp.eq.s32.totalorder %s18, 0
    %p108 = por %p106, %p107
    %s110 = sadd.s32 %s109, 1
    %p113 = scmp.eq.s32.totalorder %s12, 1
    %p114 = scmp.ne.s32.totalorder %s109, %s111
    %p115 = scmp.eq.s32.totalorder %s12, 0
    %p116 = por %p114, %p115
    %p117 = scmp.ne.s32.totalorder %s109, %s111
    %p118 = scmp.eq.s32.totalorder %s17, 1
    %p119 = por %p117, %p118
    %p120 = scmp.ne.s32.totalorder %s111, %s112
    %p121 = scmp.eq.s32.totalorder %s17, 0
    %p122 = por %p120, %p121
    %p123 = scmp.ne.s32.totalorder %s111, %s112
    %p124 = scmp.eq.s32.totalorder %s18, 1
    %p125 = por %p123, %p124
    %p127 = scmp.ne.s32.totalorder %s112, %s126
    %p128 = scmp.eq.s32.totalorder %s18, 0
    %p129 = por %p127, %p128
    %s131 = sadd.s32 %s130, 1
    %p134 = scmp.eq.s32.totalorder %s12, 1
    %p135 = scmp.ne.s32.totalorder %s130, %s132
    %p136 = scmp.eq.s32.totalorder %s12, 0
    %p137 = por %p135, %p136
    %p138 = scmp.ne.s32.totalorder %s130, %s132
    %p139 = scmp.eq.s32.totalorder %s17, 1
    %p140 = por %p138, %p139
    %p141 = scmp.ne.s32.totalorder %s132, %s133
    %p142 = scmp.eq.s32.totalorder %s17, 0
    %p143 = por %p141, %p142
    %p144 = scmp.ne.s32.totalorder %s132, %s133
    %p145 = scmp.eq.s32.totalorder %s18, 1
    %p146 = por %p144, %p145
    %p148 = scmp.ne.s32.totalorder %s133, %s147
    %p149 = scmp.eq.s32.totalorder %s18, 0
    %p150 = por %p148, %p149
    %s151 = ssub.s32 %s12, %s19
    %p152 = scmp.eq.s32.totalorder %s151, 0
    %s154 = sadd.s32 %s153, 1
    %s155 = scalar_select %p152, %s153, %s154
    %p158 = pneg %p152
    %p159 = scmp.eq.s32.totalorder %s12, 1
    %p160 = por %p158, %p159
    %p161 = scmp.ne.s32.totalorder %s153, %s156
    %p162 = scmp.eq.s32.totalorder %s12, 0
    %p163 = por %p161, %p162
    %p164 = scmp.ne.s32.totalorder %s153, %s156
    %p165 = scmp.eq.s32.totalorder %s17, 1
    %p166 = por %p164, %p165
    %p167 = scmp.ne.s32.totalorder %s156, %s157
    %p168 = scmp.eq.s32.totalorder %s17, 0
    %p169 = por %p167, %p168
    %p170 = scmp.ne.s32.totalorder %s156, %s157
    %p171 = scmp.eq.s32.totalorder %s18, 1
    %p172 = por %p170, %p171
    %p174 = scmp.ne.s32.totalorder %s157, %s173
    %p175 = scmp.eq.s32.totalorder %s18, 0
    %p176 = por %p174, %p175
    %p177 = scmp.le.s32.totalorder 1, %s12
    %p178 = scmp.lt.s32.totalorder %s12, 3
    %p179 = pnand %p177, %p178
    %p180 = pneg %p179
    // Predicated region
    $region9: #{residual_block.1} parent=5 // pred_check
      _
    $region10: #{residual_block.1} parent=5 // pred_check_branch
      %182 = sbr.rel (%p179) target = $region12
    $region11: #{residual_block.1} parent=5 // pred_region
      %s183 = ssub.s32 %s12, 1
      // Predicated region
      $region13: #{residual_block.1} parent=11 // pred_check
        %p184 = pneg %p59
      $region14: #{residual_block.1} parent=11 // pred_check_branch
        %186 = sbr.rel (%p184) target = $region16
      $region15: #{residual_block.1} parent=11 // pred_region
        _
      $region16: #{residual_block.1} parent=11 // pred_fallthru
        _
      // Predicated region
      $region17: #{residual_block.1} parent=11 // pred_check
        %p187 = pneg %p80
      $region18: #{residual_block.1} parent=11 // pred_check_branch
        %189 = sbr.rel (%p187) target = $region20
      $region19: #{residual_block.1} parent=11 // pred_region
        _
      $region20: #{residual_block.1} parent=11 // pred_fallthru
        _
      // Predicated region
      $region21: #{residual_block.1} parent=11 // pred_check
        %p190 = pneg %p101
      $region22: #{residual_block.1} parent=11 // pred_check_branch
        %192 = sbr.rel (%p190) target = $region24
      $region23: #{residual_block.1} parent=11 // pred_region
        _
      $region24: #{residual_block.1} parent=11 // pred_fallthru
        _
      // Predicated region
      $region25: #{residual_block.1} parent=11 // pred_check
        %p193 = pneg %p122
      $region26: #{residual_block.1} parent=11 // pred_check_branch
        %195 = sbr.rel (%p193) target = $region28
      $region27: #{residual_block.1} parent=11 // pred_region
        _
      $region28: #{residual_block.1} parent=11 // pred_fallthru
        _
      // Predicated region
      $region29: #{residual_block.1} parent=11 // pred_check
        %p196 = pneg %p143
      $region30: #{residual_block.1} parent=11 // pred_check_branch
        %198 = sbr.rel (%p196) target = $region32
      $region31: #{residual_block.1} parent=11 // pred_region
        _
      $region32: #{residual_block.1} parent=11 // pred_fallthru
        _
    $region12: #{residual_block.1} parent=5 // pred_fallthru
      _
    %p199 = scmp.lt.s32.totalorder %s12, 2
    // Predicated region
    $region33: #{residual_block.1} parent=5 // pred_check
      %p200 = pneg %p199
    $region34: #{residual_block.1} parent=5 // pred_check_branch
      %202 = sbr.rel (%p200) target = $region36
    $region35: #{residual_block.1} parent=5 // pred_region
      // Predicated region
      $region37: #{residual_block.1} parent=35 // pred_check
        %p203 = pneg %p32
      $region38: #{residual_block.1} parent=35 // pred_check_branch
        %205 = sbr.rel (%p203) target = $region40
      $region39: #{residual_block.1} parent=35 // pred_region
        %p206 = scmp.lt.s32.totalorder %s12, 1
        %s207 = scalar_select %p206, %s12, 1
        %s208 = smul.addr %s207, 5
        %s209 = smul.addr %s208, 4
        %s210 = scalar_lea.vmem %s0, %s209
      $region40: #{residual_block.1} parent=35 // pred_fallthru
        _
    $region36: #{residual_block.1} parent=5 // pred_fallthru
      _
    %p211 = scmp.le.s32.totalorder 1, %s12
    %p212 = scmp.lt.s32.totalorder %s12, 3
    %p213 = pnand %p211, %p212
    %p214 = pneg %p213
    // Predicated region
    $region41: #{residual_block.1} parent=5 // pred_check
      _
    $region42: #{residual_block.1} parent=5 // pred_check_branch
      %216 = sbr.rel (%p213) target = $region44
    $region43: #{residual_block.1} parent=5 // pred_region
      %s217 = ssub.s32 %s12, 1
      %p218 = scmp.lt.s32.totalorder %s17, 1
      %s219 = scalar_select %p218, %s17, 1
      %s220 = smul.addr %s219, 5
      %s221 = smul.addr %s220, 4
      %s222 = scalar_lea.vmem %s0, %s221
      %p223 = pneg %p38
      %p224 = pneg %p35
      %p225 = pneg %p59
      %p226 = pneg %p56
      %p227 = pneg %p80
      %p228 = pneg %p77
      %p229 = pneg %p101
      %p230 = pneg %p98
      %p231 = pneg %p122
      %p232 = pneg %p119
      %p233 = pneg %p143
      %p234 = pneg %p140
      %p235 = pneg %p169
      %p236 = pneg %p166
      %p237 = scmp.lt.s32.totalorder %s17, 1
      %s238 = scalar_select %p237, %s17, 1
      %s239 = smul.addr %s238, 3
      %s240 = smul.addr %s239, 4
      %s241 = scalar_lea.vmem %s6, %s240
      %p242 = scmp.lt.s32.totalorder %s17, 1
      %s243 = scalar_select %p242, %s17, 1
      %s244 = smul.addr %s243, 5
      %s245 = smul.addr %s244, 4
      %s246 = scalar_lea.vmem %s0, %s245
      %p247 = scmp.lt.s32.totalorder %s17, 1
      %s248 = scalar_select %p247, %s17, 1
      %s249 = smul.addr %s248, 3
      %s250 = smul.addr %s249, 4
      %s251 = scalar_lea.vmem %s6, %s250
      %v253 = vld [vmem:[%s246] sm:$0xff]
      %v254 = vld [vmem:[%s246 + $0x8] sm:$0xff]
      %v255 = vld [vmem:[%s246 + $0x10] sm:$0xf]
      %v256 = vld [vmem:[%s1] sm:$0xff]
      %v257 = vld [vmem:[%s1 + $0x8] sm:$0xff]
      %v258 = vld [vmem:[%s1 + $0x10] sm:$0xff]
      %v259 = vld [vmem:[%s1 + $0x18] sm:$0xff]
      %v260 = vld [vmem:[%s1 + $0x20] sm:$0xff]
      %v261 = vld [vmem:[%s2] sm:$0x3]
      %v262 = vld [vmem:[%s2 + $0x2] sm:$0x3]
      %v263 = vld [vmem:[%s2 + $0x4] sm:$0x3]
      %v264 = vld [vmem:[%s2 + $0x6] sm:$0x3]
      %v265 = vld [vmem:[%s2 + $0x8] sm:$0x3]
      %v266 = vld [vmem:[%s2 + $0xa] sm:$0x3]
      %v267 = vld [vmem:[%s2 + $0xc] sm:$0x3]
      %v268 = vld [vmem:[%s2 + $0xe] sm:$0x3]
      %v269 = vld [vmem:[%s2 + $0x10] sm:$0x3]
      %v270 = vld [vmem:[%s4] sm:$0x3]
      %v271 = vld [vmem:[%s4 + $0x2] sm:$0x3]
      %v272 = vld [vmem:[%s4 + $0x4] sm:$0x3]
      %v273 = vld [vmem:[%s4 + $0x6] sm:$0x3]
      %v274 = vld [vmem:[%s4 + $0x8] sm:$0x3]
      %v275 = vld [vmem:[%s4 + $0xa] sm:$0x3]
      %v276 = vld [vmem:[%s4 + $0xc] sm:$0x3]
      %v277 = vld [vmem:[%s4 + $0xe] sm:$0x3]
      %v278 = vld [vmem:[%s4 + $0x10] sm:$0x3]
      %v279 = vld [vmem:[%s3] sm:$0xf]
      %v280 = vld [vmem:[%s5] sm:$0xf]
      %284 = vst [vmem:[#allocation1] ss:$2 sm:$0xff] %v253
      %s285 = scalar_lea.vmem [#allocation1], 16
      %286 = vst [vmem:[%s285] ss:$2 sm:$0xff] %v254
      %s287 = scalar_lea.vmem [#allocation1], 32
      %288 = vst [vmem:[%s287] ss:$2 sm:$0xff] %v255
      %v289 = vld.sshfl [vmem:[#allocation1] sm:$0xff pattern:$0x75316420]
      %v290 = vld.sshfl [vmem:[#allocation1 + $0x8] sm:$0xff pattern:$0x75316420]
      %v291 = vld.sshfl [vmem:[#allocation1 + $0x10] sm:$0xff pattern:$0x75316420]
      %v292 = vld.sshfl [vmem:[#allocation1 + $0x18] sm:$0xff pattern:$0x75316420]
      %v293 = vld.sshfl [vmem:[#allocation1 + $0x20] sm:$0xff pattern:$0x75316420]
      %v299 = vpack.c.bf16 %v290, %v289
      %v300 = vpack.c.bf16 %v292, %v291
      %v301 = vpack.c.bf16 %v293, %v293
      %v305 = vunpack.c.l.b16 %v299
      %v306 = vunpack.c.h.b16 %v299
      %v307 = vunpack.c.l.b16 %v300
      %v308 = vunpack.c.h.b16 %v300
      %v309 = vunpack.c.l.b16 %v301
      %v310 = vpack.c.b16 %v305, %v305
      %v311 = vpack.c.b16 %v306, %v306
      %v312 = vpack.c.b16 %v307, %v307
      %v313 = vpack.c.b16 %v308, %v308
      %v314 = vpack.c.b16 %v309, %v309
      %315 = vrot.lane.b32.xlu0 %v310, 75
      %v316 = vpop.permute.xlu0 %315
      %317 = vrot.lane.b32.xlu0 %v311, 75
      %v318 = vpop.permute.xlu0 %317
      %319 = vrot.lane.b32.xlu0 %v312, 75
      %v320 = vpop.permute.xlu0 %319
      %321 = vrot.lane.b32.xlu0 %v313, 75
      %v322 = vpop.permute.xlu0 %321
      %323 = vrot.lane.b32.xlu0 %v314, 75
      %v324 = vpop.permute.xlu0 %323
      %vm325 = vcmask 613376
      %v326 = vsel %vm325, %v316, %v318
      %v327 = vsel %vm325, %v318, %v320
      %v328 = vsel %vm325, %v320, %v322
      %v329 = vsel %vm325, %v322, %v324
      %vm330 = vcmask 31744
      %v332 = vsel %vm330, %v262, 0
      %vm334 = vcmask 1041408
      %v336 = vsel %vm334, %v326, 0
      %v339 = vsel %vm334, %v327, 0
      %v342 = vsel %vm334, %v328, 0
      %v345 = vsel %vm334, %v329, 0
      %347 = vmatpush.bf16.msra.mxu0 0
      %348 = vmatpush.bf16.msra.mxu0 0
      %349 = vmatpush.bf16.msra.mxu0 0
      %350 = vmatpush.bf16.msra.mxu0 0
      %351 = vmatpush.bf16.msra.mxu0 0
      %352 = vmatpush.bf16.msra.mxu0 0
      %353 = vmatpush.bf16.msra.mxu0 0
      %354 = vmatpush.bf16.msra.mxu0 %v336
      %355 = vmatmul.bf16.gmra.mxu0 %v332
      %v356 = vpop.f32.mrf.mxu0
      %v357 = vadd.f32 0.0, %v356
      %v358 = vpop.f32.mrf.mxu0
      %359 = vdwg.mxu0
      %360 = vmatpush.bf16.msra.mxu0 0
      %361 = vmatpush.bf16.msra.mxu0 0
      %362 = vmatpush.bf16.msra.mxu0 0
      %363 = vmatpush.bf16.msra.mxu0 0
      %364 = vmatpush.bf16.msra.mxu0 0
      %365 = vmatpush.bf16.msra.mxu0 0
      %366 = vmatpush.bf16.msra.mxu0 0
      %367 = vmatpush.bf16.msra.mxu0 %v339
      %368 = vmatmul.bf16.gmra.mxu0 %v332
      %v369 = vpop.f32.mrf.mxu0
      %v370 = vadd.f32 0.0, %v369
      %v371 = vpop.f32.mrf.mxu0
      %372 = vdwg.mxu0
      %373 = vmatpush.bf16.msra.mxu0 0
      %374 = vmatpush.bf16.msra.mxu0 0
      %375 = vmatpush.bf16.msra.mxu0 0
      %376 = vmatpush.bf16.msra.mxu0 0
      %377 = vmatpush.bf16.msra.mxu0 0
      %378 = vmatpush.bf16.msra.mxu0 0
      %379 = vmatpush.bf16.msra.mxu0 0
      %380 = vmatpush.bf16.msra.mxu0 %v342
      %381 = vmatmul.bf16.gmra.mxu0 %v332
      %v382 = vpop.f32.mrf.mxu0
      %v383 = vadd.f32 0.0, %v382
      %v384 = vpop.f32.mrf.mxu0
      %385 = vdwg.mxu0
      %386 = vmatpush.bf16.msra.mxu0 0
      %387 = vmatpush.bf16.msra.mxu0 0
      %388 = vmatpush.bf16.msra.mxu0 0
      %389 = vmatpush.bf16.msra.mxu0 0
      %390 = vmatpush.bf16.msra.mxu0 0
      %391 = vmatpush.bf16.msra.mxu0 0
      %392 = vmatpush.bf16.msra.mxu0 0
      %393 = vmatpush.bf16.msra.mxu0 %v345
      %394 = vmatmul.bf16.gmra.mxu0 %v332
      %v395 = vpop.f32.mrf.mxu0
      %v396 = vadd.f32 0.0, %v395
      %v397 = vpop.f32.mrf.mxu0
      %398 = vdwg.mxu0
      %399 = vrot.lane.b32.xlu0 %v310, 76
      %v400 = vpop.permute.xlu0 %399
      %401 = vrot.lane.b32.xlu0 %v311, 76
      %v402 = vpop.permute.xlu0 %401
      %403 = vrot.lane.b32.xlu0 %v312, 76
      %v404 = vpop.permute.xlu0 %403
      %405 = vrot.lane.b32.xlu0 %v313, 76
      %v406 = vpop.permute.xlu0 %405
      %407 = vrot.lane.b32.xlu0 %v314, 76
      %v408 = vpop.permute.xlu0 %407
      %vm409 = vcmask 621568
      %v410 = vsel %vm409, %v400, %v402
      %v411 = vsel %vm409, %v402, %v404
      %v412 = vsel %vm409, %v404, %v406
      %v413 = vsel %vm409, %v406, %v408
      %v415 = vsel %vm330, %v261, 0
      %v418 = vsel %vm334, %v410, 0
      %v421 = vsel %vm334, %v411, 0
      %v424 = vsel %vm334, %v412, 0
      %v427 = vsel %vm334, %v413, 0
      %429 = vmatpush.bf16.msra.mxu0 0
      %430 = vmatpush.bf16.msra.mxu0 0
      %431 = vmatpush.bf16.msra.mxu0 0
      %432 = vmatpush.bf16.msra.mxu0 0
      %433 = vmatpush.bf16.msra.mxu0 0
      %434 = vmatpush.bf16.msra.mxu0 0
      %435 = vmatpush.bf16.msra.mxu0 0
      %436 = vmatpush.bf16.msra.mxu0 %v418
      %437 = vmatmul.bf16.gmra.mxu0 %v415
      %v438 = vpop.f32.mrf.mxu0
      %v439 = vadd.f32 %v357, %v438
      %v440 = vpop.f32.mrf.mxu0
      %441 = vdwg.mxu0
      %442 = vmatpush.bf16.msra.mxu0 0
      %443 = vmatpush.bf16.msra.mxu0 0
      %444 = vmatpush.bf16.msra.mxu0 0
      %445 = vmatpush.bf16.msra.mxu0 0
      %446 = vmatpush.bf16.msra.mxu0 0
      %447 = vmatpush.bf16.msra.mxu0 0
      %448 = vmatpush.bf16.msra.mxu0 0
      %449 = vmatpush.bf16.msra.mxu0 %v421
      %450 = vmatmul.bf16.gmra.mxu0 %v415
      %v451 = vpop.f32.mrf.mxu0
      %v452 = vadd.f32 %v370, %v451
      %v453 = vpop.f32.mrf.mxu0
      %454 = vdwg.mxu0
      %455 = vmatpush.bf16.msra.mxu0 0
      %456 = vmatpush.bf16.msra.mxu0 0
      %457 = vmatpush.bf16.msra.mxu0 0
      %458 = vmatpush.bf16.msra.mxu0 0
      %459 = vmatpush.bf16.msra.mxu0 0
      %460 = vmatpush.bf16.msra.mxu0 0
      %461 = vmatpush.bf16.msra.mxu0 0
      %462 = vmatpush.bf16.msra.mxu0 %v424
      %463 = vmatmul.bf16.gmra.mxu0 %v415
      %v464 = vpop.f32.mrf.mxu0
      %v465 = vadd.f32 %v383, %v464
      %v466 = vpop.f32.mrf.mxu0
      %467 = vdwg.mxu0
      %468 = vmatpush.bf16.msra.mxu0 0
      %469 = vmatpush.bf16.msra.mxu0 0
      %470 = vmatpush.bf16.msra.mxu0 0
      %471 = vmatpush.bf16.msra.mxu0 0
      %472 = vmatpush.bf16.msra.mxu0 0
      %473 = vmatpush.bf16.msra.mxu0 0
      %474 = vmatpush.bf16.msra.mxu0 0
      %475 = vmatpush.bf16.msra.mxu0 %v427
      %476 = vmatmul.bf16.gmra.mxu0 %v415
      %v477 = vpop.f32.mrf.mxu0
      %v478 = vadd.f32 %v396, %v477
      %v479 = vpop.f32.mrf.mxu0
      %480 = vdwg.mxu0
      %481 = vrot.lane.b32.xlu0 %v310, 74
      %v482 = vpop.permute.xlu0 %481
      %483 = vrot.lane.b32.xlu0 %v311, 74
      %v484 = vpop.permute.xlu0 %483
      %485 = vrot.lane.b32.xlu0 %v312, 74
      %v486 = vpop.permute.xlu0 %485
      %487 = vrot.lane.b32.xlu0 %v313, 74
      %v488 = vpop.permute.xlu0 %487
      %489 = vrot.lane.b32.xlu0 %v314, 74
      %v490 = vpop.permute.xlu0 %489
      %vm491 = vcmask 605184
      %v492 = vsel %vm491, %v482, %v484
      %v493 = vsel %vm491, %v484, %v486
      %v494 = vsel %vm491, %v486, %v488
      %v495 = vsel %vm491, %v488, %v490
      %v497 = vsel %vm330, %v263, 0
      %v500 = vsel %vm334, %v492, 0
      %v503 = vsel %vm334, %v493, 0
      %v506 = vsel %vm334, %v494, 0
      %v509 = vsel %vm334, %v495, 0
      %511 = vmatpush.bf16.msra.mxu0 0
      %512 = vmatpush.bf16.msra.mxu0 0
      %513 = vmatpush.bf16.msra.mxu0 0
      %514 = vmatpush.bf16.msra.mxu0 0
      %515 = vmatpush.bf16.msra.mxu0 0
      %516 = vmatpush.bf16.msra.mxu0 0
      %517 = vmatpush.bf16.msra.mxu0 0
      %518 = vmatpush.bf16.msra.mxu0 %v500
      %519 = vmatmul.bf16.gmra.mxu0 %v497
      %v520 = vpop.f32.mrf.mxu0
      %v521 = vadd.f32 0.0, %v520
      %v522 = vpop.f32.mrf.mxu0
      %523 = vdwg.mxu0
      %524 = vmatpush.bf16.msra.mxu0 0
      %525 = vmatpush.bf16.msra.mxu0 0
      %526 = vmatpush.bf16.msra.mxu0 0
      %527 = vmatpush.bf16.msra.mxu0 0
      %528 = vmatpush.bf16.msra.mxu0 0
      %529 = vmatpush.bf16.msra.mxu0 0
      %530 = vmatpush.bf16.msra.mxu0 0
      %531 = vmatpush.bf16.msra.mxu0 %v503
      %532 = vmatmul.bf16.gmra.mxu0 %v497
      %v533 = vpop.f32.mrf.mxu0
      %v534 = vadd.f32 0.0, %v533
      %v535 = vpop.f32.mrf.mxu0
      %536 = vdwg.mxu0
      %537 = vmatpush.bf16.msra.mxu0 0
      %538 = vmatpush.bf16.msra.mxu0 0
      %539 = vmatpush.bf16.msra.mxu0 0
      %540 = vmatpush.bf16.msra.mxu0 0
      %541 = vmatpush.bf16.msra.mxu0 0
      %542 = vmatpush.bf16.msra.mxu0 0
      %543 = vmatpush.bf16.msra.mxu0 0
      %544 = vmatpush.bf16.msra.mxu0 %v506
      %545 = vmatmul.bf16.gmra.mxu0 %v497
      %v546 = vpop.f32.mrf.mxu0
      %v547 = vadd.f32 0.0, %v546
      %v548 = vpop.f32.mrf.mxu0
      %549 = vdwg.mxu0
      %550 = vmatpush.bf16.msra.mxu0 0
      %551 = vmatpush.bf16.msra.mxu0 0
      %552 = vmatpush.bf16.msra.mxu0 0
      %553 = vmatpush.bf16.msra.mxu0 0
      %554 = vmatpush.bf16.msra.mxu0 0
      %555 = vmatpush.bf16.msra.mxu0 0
      %556 = vmatpush.bf16.msra.mxu0 0
      %557 = vmatpush.bf16.msra.mxu0 %v509
      %558 = vmatmul.bf16.gmra.mxu0 %v497
      %v559 = vpop.f32.mrf.mxu0
      %v560 = vadd.f32 0.0, %v559
      %v561 = vpop.f32.mrf.mxu0
      %562 = vdwg.mxu0
      %v563 = vadd.f32 %v439, %v521
      %v564 = vadd.f32 %v452, %v534
      %v565 = vadd.f32 %v465, %v547
      %v566 = vadd.f32 %v478, %v560
      %567 = vrot.lane.b32.xlu0 %v310, 58
      %v568 = vpop.permute.xlu0 %567
      %569 = vrot.lane.b32.xlu0 %v311, 58
      %v570 = vpop.permute.xlu0 %569
      %571 = vrot.lane.b32.xlu0 %v312, 58
      %v572 = vpop.permute.xlu0 %571
      %573 = vrot.lane.b32.xlu0 %v313, 58
      %v574 = vpop.permute.xlu0 %573
      %575 = vrot.lane.b32.xlu0 %v314, 58
      %v576 = vpop.permute.xlu0 %575
      %vm577 = vcmask 474112
      %v578 = vsel %vm577, %v568, %v570
      %v579 = vsel %vm577, %v570, %v572
      %v580 = vsel %vm577, %v572, %v574
      %v581 = vsel %vm577, %v574, %v576
      %v583 = vsel %vm330, %v264, 0
      %v586 = vsel %vm334, %v578, 0
      %v589 = vsel %vm334, %v579, 0
      %v592 = vsel %vm334, %v580, 0
      %v595 = vsel %vm334, %v581, 0
      %597 = vmatpush.bf16.msra.mxu0 0
      %598 = vmatpush.bf16.msra.mxu0 0
      %599 = vmatpush.bf16.msra.mxu0 0
      %600 = vmatpush.bf16.msra.mxu0 0
      %601 = vmatpush.bf16.msra.mxu0 0
      %602 = vmatpush.bf16.msra.mxu0 0
      %603 = vmatpush.bf16.msra.mxu0 0
      %604 = vmatpush.bf16.msra.mxu0 %v586
      %605 = vmatmul.bf16.gmra.mxu0 %v583
      %v606 = vpop.f32.mrf.mxu0
      %v607 = vadd.f32 0.0, %v606
      %v608 = vpop.f32.mrf.mxu0
      %609 = vdwg.mxu0
      %610 = vmatpush.bf16.msra.mxu0 0
      %611 = vmatpush.bf16.msra.mxu0 0
      %612 = vmatpush.bf16.msra.mxu0 0
      %613 = vmatpush.bf16.msra.mxu0 0
      %614 = vmatpush.bf16.msra.mxu0 0
      %615 = vmatpush.bf16.msra.mxu0 0
      %616 = vmatpush.bf16.msra.mxu0 0
      %617 = vmatpush.bf16.msra.mxu0 %v589
      %618 = vmatmul.bf16.gmra.mxu0 %v583
      %v619 = vpop.f32.mrf.mxu0
      %v620 = vadd.f32 0.0, %v619
      %v621 = vpop.f32.mrf.mxu0
      %622 = vdwg.mxu0
      %623 = vmatpush.bf16.msra.mxu0 0
      %624 = vmatpush.bf16.msra.mxu0 0
      %625 = vmatpush.bf16.msra.mxu0 0
      %626 = vmatpush.bf16.msra.mxu0 0
      %627 = vmatpush.bf16.msra.mxu0 0
      %628 = vmatpush.bf16.msra.mxu0 0
      %629 = vmatpush.bf16.msra.mxu0 0
      %630 = vmatpush.bf16.msra.mxu0 %v592
      %631 = vmatmul.bf16.gmra.mxu0 %v583
      %v632 = vpop.f32.mrf.mxu0
      %v633 = vadd.f32 0.0, %v632
      %v634 = vpop.f32.mrf.mxu0
      %635 = vdwg.mxu0
      %636 = vmatpush.bf16.msra.mxu0 0
      %637 = vmatpush.bf16.msra.mxu0 0
      %638 = vmatpush.bf16.msra.mxu0 0
      %639 = vmatpush.bf16.msra.mxu0 0
      %640 = vmatpush.bf16.msra.mxu0 0
      %641 = vmatpush.bf16.msra.mxu0 0
      %642 = vmatpush.bf16.msra.mxu0 0
      %643 = vmatpush.bf16.msra.mxu0 %v595
      %644 = vmatmul.bf16.gmra.mxu0 %v583
      %v645 = vpop.f32.mrf.mxu0
      %v646 = vadd.f32 0.0, %v645
      %v647 = vpop.f32.mrf.mxu0
      %648 = vdwg.mxu0
      %v649 = vadd.f32 %v563, %v607
      %v650 = vadd.f32 %v564, %v620
      %v651 = vadd.f32 %v565, %v633
      %v652 = vadd.f32 %v566, %v646
      %653 = vrot.lane.b32.xlu0 %v310, 57
      %v654 = vpop.permute.xlu0 %653
      %655 = vrot.lane.b32.xlu0 %v311, 57
      %v656 = vpop.permute.xlu0 %655
      %657 = vrot.lane.b32.xlu0 %v312, 57
      %v658 = vpop.permute.xlu0 %657
      %659 = vrot.lane.b32.xlu0 %v313, 57
      %v660 = vpop.permute.xlu0 %659
      %661 = vrot.lane.b32.xlu0 %v314, 57
      %v662 = vpop.permute.xlu0 %661
      %vm663 = vcmask 465920
      %v664 = vsel %vm663, %v654, %v656
      %v665 = vsel %vm663, %v656, %v658
      %v666 = vsel %vm663, %v658, %v660
      %v667 = vsel %vm663, %v660, %v662
      %v669 = vsel %vm330, %v265, 0
      %v672 = vsel %vm334, %v664, 0
      %v675 = vsel %vm334, %v665, 0
      %v678 = vsel %vm334, %v666, 0
      %v681 = vsel %vm334, %v667, 0
      %683 = vmatpush.bf16.msra.mxu0 0
      %684 = vmatpush.bf16.msra.mxu0 0
      %685 = vmatpush.bf16.msra.mxu0 0
      %686 = vmatpush.bf16.msra.mxu0 0
      %687 = vmatpush.bf16.msra.mxu0 0
      %688 = vmatpush.bf16.msra.mxu0 0
      %689 = vmatpush.bf16.msra.mxu0 0
      %690 = vmatpush.bf16.msra.mxu0 %v672
      %691 = vmatmul.bf16.gmra.mxu0 %v669
      %v692 = vpop.f32.mrf.mxu0
      %v693 = vadd.f32 0.0, %v692
      %v694 = vpop.f32.mrf.mxu0
      %695 = vdwg.mxu0
      %696 = vmatpush.bf16.msra.mxu0 0
      %697 = vmatpush.bf16.msra.mxu0 0
      %698 = vmatpush.bf16.msra.mxu0 0
      %699 = vmatpush.bf16.msra.mxu0 0
      %700 = vmatpush.bf16.msra.mxu0 0
      %701 = vmatpush.bf16.msra.mxu0 0
      %702 = vmatpush.bf16.msra.mxu0 0
      %703 = vmatpush.bf16.msra.mxu0 %v675
      %704 = vmatmul.bf16.gmra.mxu0 %v669
      %v705 = vpop.f32.mrf.mxu0
      %v706 = vadd.f32 0.0, %v705
      %v707 = vpop.f32.mrf.mxu0
      %708 = vdwg.mxu0
      %709 = vmatpush.bf16.msra.mxu0 0
      %710 = vmatpush.bf16.msra.mxu0 0
      %711 = vmatpush.bf16.msra.mxu0 0
      %712 = vmatpush.bf16.msra.mxu0 0
      %713 = vmatpush.bf16.msra.mxu0 0
      %714 = vmatpush.bf16.msra.mxu0 0
      %715 = vmatpush.bf16.msra.mxu0 0
      %716 = vmatpush.bf16.msra.mxu0 %v678
      %717 = vmatmul.bf16.gmra.mxu0 %v669
      %v718 = vpop.f32.mrf.mxu0
      %v719 = vadd.f32 0.0, %v718
      %v720 = vpop.f32.mrf.mxu0
      %721 = vdwg.mxu0
      %722 = vmatpush.bf16.msra.mxu0 0
      %723 = vmatpush.bf16.msra.mxu0 0
      %724 = vmatpush.bf16.msra.mxu0 0
      %725 = vmatpush.bf16.msra.mxu0 0
      %726 = vmatpush.bf16.msra.mxu0 0
      %727 = vmatpush.bf16.msra.mxu0 0
      %728 = vmatpush.bf16.msra.mxu0 0
      %729 = vmatpush.bf16.msra.mxu0 %v681
      %730 = vmatmul.bf16.gmra.mxu0 %v669
      %v731 = vpop.f32.mrf.mxu0
      %v732 = vadd.f32 0.0, %v731
      %v733 = vpop.f32.mrf.mxu0
      %734 = vdwg.mxu0
      %v735 = vadd.f32 %v649, %v693
      %v736 = vadd.f32 %v650, %v706
      %v737 = vadd.f32 %v651, %v719
      %v738 = vadd.f32 %v652, %v732
      %739 = vrot.lane.b32.xlu0 %v310, 56
      %v740 = vpop.permute.xlu0 %739
      %741 = vrot.lane.b32.xlu0 %v311, 56
      %v742 = vpop.permute.xlu0 %741
      %743 = vrot.lane.b32.xlu0 %v312, 56
      %v744 = vpop.permute.xlu0 %743
      %745 = vrot.lane.b32.xlu0 %v313, 56
      %v746 = vpop.permute.xlu0 %745
      %747 = vrot.lane.b32.xlu0 %v314, 56
      %v748 = vpop.permute.xlu0 %747
      %vm749 = vcmask 457728
      %v750 = vsel %vm749, %v740, %v742
      %v751 = vsel %vm749, %v742, %v744
      %v752 = vsel %vm749, %v744, %v746
      %v753 = vsel %vm749, %v746, %v748
      %v755 = vsel %vm330, %v266, 0
      %v758 = vsel %vm334, %v750, 0
      %v761 = vsel %vm334, %v751, 0
      %v764 = vsel %vm334, %v752, 0
      %v767 = vsel %vm334, %v753, 0
      %769 = vmatpush.bf16.msra.mxu0 0
      %770 = vmatpush.bf16.msra.mxu0 0
      %771 = vmatpush.bf16.msra.mxu0 0
      %772 = vmatpush.bf16.msra.mxu0 0
      %773 = vmatpush.bf16.msra.mxu0 0
      %774 = vmatpush.bf16.msra.mxu0 0
      %775 = vmatpush.bf16.msra.mxu0 0
      %776 = vmatpush.bf16.msra.mxu0 %v758
      %777 = vmatmul.bf16.gmra.mxu0 %v755
      %v778 = vpop.f32.mrf.mxu0
      %v779 = vadd.f32 0.0, %v778
      %v780 = vpop.f32.mrf.mxu0
      %781 = vdwg.mxu0
      %782 = vmatpush.bf16.msra.mxu0 0
      %783 = vmatpush.bf16.msra.mxu0 0
      %784 = vmatpush.bf16.msra.mxu0 0
      %785 = vmatpush.bf16.msra.mxu0 0
      %786 = vmatpush.bf16.msra.mxu0 0
      %787 = vmatpush.bf16.msra.mxu0 0
      %788 = vmatpush.bf16.msra.mxu0 0
      %789 = vmatpush.bf16.msra.mxu0 %v761
      %790 = vmatmul.bf16.gmra.mxu0 %v755
      %v791 = vpop.f32.mrf.mxu0
      %v792 = vadd.f32 0.0, %v791
      %v793 = vpop.f32.mrf.mxu0
      %794 = vdwg.mxu0
      %795 = vmatpush.bf16.msra.mxu0 0
      %796 = vmatpush.bf16.msra.mxu0 0
      %797 = vmatpush.bf16.msra.mxu0 0
      %798 = vmatpush.bf16.msra.mxu0 0
      %799 = vmatpush.bf16.msra.mxu0 0
      %800 = vmatpush.bf16.msra.mxu0 0
      %801 = vmatpush.bf16.msra.mxu0 0
      %802 = vmatpush.bf16.msra.mxu0 %v764
      %803 = vmatmul.bf16.gmra.mxu0 %v755
      %v804 = vpop.f32.mrf.mxu0
      %v805 = vadd.f32 0.0, %v804
      %v806 = vpop.f32.mrf.mxu0
      %807 = vdwg.mxu0
      %808 = vmatpush.bf16.msra.mxu0 0
      %809 = vmatpush.bf16.msra.mxu0 0
      %810 = vmatpush.bf16.msra.mxu0 0
      %811 = vmatpush.bf16.msra.mxu0 0
      %812 = vmatpush.bf16.msra.mxu0 0
      %813 = vmatpush.bf16.msra.mxu0 0
      %814 = vmatpush.bf16.msra.mxu0 0
      %815 = vmatpush.bf16.msra.mxu0 %v767
      %816 = vmatmul.bf16.gmra.mxu0 %v755
      %v817 = vpop.f32.mrf.mxu0
      %v818 = vadd.f32 0.0, %v817
      %v819 = vpop.f32.mrf.mxu0
      %820 = vdwg.mxu0
      %v821 = vadd.f32 %v735, %v779
      %v822 = vadd.f32 %v736, %v792
      %v823 = vadd.f32 %v737, %v805
      %v824 = vadd.f32 %v738, %v818
      %825 = vrot.lane.b32.xlu0 %v310, 40
      %v826 = vpop.permute.xlu0 %825
      %827 = vrot.lane.b32.xlu0 %v311, 40
      %v828 = vpop.permute.xlu0 %827
      %829 = vrot.lane.b32.xlu0 %v312, 40
      %v830 = vpop.permute.xlu0 %829
      %831 = vrot.lane.b32.xlu0 %v313, 40
      %v832 = vpop.permute.xlu0 %831
      %833 = vrot.lane.b32.xlu0 %v314, 40
      %v834 = vpop.permute.xlu0 %833
      %vm835 = vcmask 326656
      %v836 = vsel %vm835, %v826, %v828
      %v837 = vsel %vm835, %v828, %v830
      %v838 = vsel %vm835, %v830, %v832
      %v839 = vsel %vm835, %v832, %v834
      %v841 = vsel %vm330, %v267, 0
      %v844 = vsel %vm334, %v836, 0
      %v847 = vsel %vm334, %v837, 0
      %v850 = vsel %vm334, %v838, 0
      %v853 = vsel %vm334, %v839, 0
      %855 = vmatpush.bf16.msra.mxu0 0
      %856 = vmatpush.bf16.msra.mxu0 0
      %857 = vmatpush.bf16.msra.mxu0 0
      %858 = vmatpush.bf16.msra.mxu0 0
      %859 = vmatpush.bf16.msra.mxu0 0
      %860 = vmatpush.bf16.msra.mxu0 0
      %861 = vmatpush.bf16.msra.mxu0 0
      %862 = vmatpush.bf16.msra.mxu0 %v844
      %863 = vmatmul.bf16.gmra.mxu0 %v841
      %v864 = vpop.f32.mrf.mxu0
      %v865 = vadd.f32 0.0, %v864
      %v866 = vpop.f32.mrf.mxu0
      %867 = vdwg.mxu0
      %868 = vmatpush.bf16.msra.mxu0 0
      %869 = vmatpush.bf16.msra.mxu0 0
      %870 = vmatpush.bf16.msra.mxu0 0
      %871 = vmatpush.bf16.msra.mxu0 0
      %872 = vmatpush.bf16.msra.mxu0 0
      %873 = vmatpush.bf16.msra.mxu0 0
      %874 = vmatpush.bf16.msra.mxu0 0
      %875 = vmatpush.bf16.msra.mxu0 %v847
      %876 = vmatmul.bf16.gmra.mxu0 %v841
      %v877 = vpop.f32.mrf.mxu0
      %v878 = vadd.f32 0.0, %v877
      %v879 = vpop.f32.mrf.mxu0
      %880 = vdwg.mxu0
      %881 = vmatpush.bf16.msra.mxu0 0
      %882 = vmatpush.bf16.msra.mxu0 0
      %883 = vmatpush.bf16.msra.mxu0 0
      %884 = vmatpush.bf16.msra.mxu0 0
      %885 = vmatpush.bf16.msra.mxu0 0
      %886 = vmatpush.bf16.msra.mxu0 0
      %887 = vmatpush.bf16.msra.mxu0 0
      %888 = vmatpush.bf16.msra.mxu0 %v850
      %889 = vmatmul.bf16.gmra.mxu0 %v841
      %v890 = vpop.f32.mrf.mxu0
      %v891 = vadd.f32 0.0, %v890
      %v892 = vpop.f32.mrf.mxu0
      %893 = vdwg.mxu0
      %894 = vmatpush.bf16.msra.mxu0 0
      %895 = vmatpush.bf16.msra.mxu0 0
      %896 = vmatpush.bf16.msra.mxu0 0
      %897 = vmatpush.bf16.msra.mxu0 0
      %898 = vmatpush.bf16.msra.mxu0 0
      %899 = vmatpush.bf16.msra.mxu0 0
      %900 = vmatpush.bf16.msra.mxu0 0
      %901 = vmatpush.bf16.msra.mxu0 %v853
      %902 = vmatmul.bf16.gmra.mxu0 %v841
      %v903 = vpop.f32.mrf.mxu0
      %v904 = vadd.f32 0.0, %v903
      %v905 = vpop.f32.mrf.mxu0
      %906 = vdwg.mxu0
      %v907 = vadd.f32 %v821, %v865
      %v908 = vadd.f32 %v822, %v878
      %v909 = vadd.f32 %v823, %v891
      %v910 = vadd.f32 %v824, %v904
      %911 = vrot.lane.b32.xlu0 %v310, 39
      %v912 = vpop.permute.xlu0 %911
      %913 = vrot.lane.b32.xlu0 %v311, 39
      %v914 = vpop.permute.xlu0 %913
      %915 = vrot.lane.b32.xlu0 %v312, 39
      %v916 = vpop.permute.xlu0 %915
      %917 = vrot.lane.b32.xlu0 %v313, 39
      %v918 = vpop.permute.xlu0 %917
      %919 = vrot.lane.b32.xlu0 %v314, 39
      %v920 = vpop.permute.xlu0 %919
      %vm921 = vcmask 318464
      %v922 = vsel %vm921, %v912, %v914
      %v923 = vsel %vm921, %v914, %v916
      %v924 = vsel %vm921, %v916, %v918
      %v925 = vsel %vm921, %v918, %v920
      %v927 = vsel %vm330, %v268, 0
      %v930 = vsel %vm334, %v922, 0
      %v933 = vsel %vm334, %v923, 0
      %v936 = vsel %vm334, %v924, 0
      %v939 = vsel %vm334, %v925, 0
      %941 = vmatpush.bf16.msra.mxu0 0
      %942 = vmatpush.bf16.msra.mxu0 0
      %943 = vmatpush.bf16.msra.mxu0 0
      %944 = vmatpush.bf16.msra.mxu0 0
      %945 = vmatpush.bf16.msra.mxu0 0
      %946 = vmatpush.bf16.msra.mxu0 0
      %947 = vmatpush.bf16.msra.mxu0 0
      %948 = vmatpush.bf16.msra.mxu0 %v930
      %949 = vmatmul.bf16.gmra.mxu0 %v927
      %v950 = vpop.f32.mrf.mxu0
      %v951 = vadd.f32 0.0, %v950
      %v952 = vpop.f32.mrf.mxu0
      %953 = vdwg.mxu0
      %954 = vmatpush.bf16.msra.mxu0 0
      %955 = vmatpush.bf16.msra.mxu0 0
      %956 = vmatpush.bf16.msra.mxu0 0
      %957 = vmatpush.bf16.msra.mxu0 0
      %958 = vmatpush.bf16.msra.mxu0 0
      %959 = vmatpush.bf16.msra.mxu0 0
      %960 = vmatpush.bf16.msra.mxu0 0
      %961 = vmatpush.bf16.msra.mxu0 %v933
      %962 = vmatmul.bf16.gmra.mxu0 %v927
      %v963 = vpop.f32.mrf.mxu0
      %v964 = vadd.f32 0.0, %v963
      %v965 = vpop.f32.mrf.mxu0
      %966 = vdwg.mxu0
      %967 = vmatpush.bf16.msra.mxu0 0
      %968 = vmatpush.bf16.msra.mxu0 0
      %969 = vmatpush.bf16.msra.mxu0 0
      %970 = vmatpush.bf16.msra.mxu0 0
      %971 = vmatpush.bf16.msra.mxu0 0
      %972 = vmatpush.bf16.msra.mxu0 0
      %973 = vmatpush.bf16.msra.mxu0 0
      %974 = vmatpush.bf16.msra.mxu0 %v936
      %975 = vmatmul.bf16.gmra.mxu0 %v927
      %v976 = vpop.f32.mrf.mxu0
      %v977 = vadd.f32 0.0, %v976
      %v978 = vpop.f32.mrf.mxu0
      %979 = vdwg.mxu0
      %980 = vmatpush.bf16.msra.mxu0 0
      %981 = vmatpush.bf16.msra.mxu0 0
      %982 = vmatpush.bf16.msra.mxu0 0
      %983 = vmatpush.bf16.msra.mxu0 0
      %984 = vmatpush.bf16.msra.mxu0 0
      %985 = vmatpush.bf16.msra.mxu0 0
      %986 = vmatpush.bf16.msra.mxu0 0
      %987 = vmatpush.bf16.msra.mxu0 %v939
      %988 = vmatmul.bf16.gmra.mxu0 %v927
      %v989 = vpop.f32.mrf.mxu0
      %v990 = vadd.f32 0.0, %v989
      %v991 = vpop.f32.mrf.mxu0
      %992 = vdwg.mxu0
      %v993 = vadd.f32 %v907, %v951
      %v994 = vadd.f32 %v908, %v964
      %v995 = vadd.f32 %v909, %v977
      %v996 = vadd.f32 %v910, %v990
      %997 = vrot.lane.b32.xlu0 %v310, 38
      %v998 = vpop.permute.xlu0 %997
      %999 = vrot.lane.b32.xlu0 %v311, 38
      %v1000 = vpop.permute.xlu0 %999
      %1001 = vrot.lane.b32.xlu0 %v312, 38
      %v1002 = vpop.permute.xlu0 %1001
      %1003 = vrot.lane.b32.xlu0 %v313, 38
      %v1004 = vpop.permute.xlu0 %1003
      %1005 = vrot.lane.b32.xlu0 %v314, 38
      %v1006 = vpop.permute.xlu0 %1005
      %vm1007 = vcmask 310272
      %v1008 = vsel %vm1007, %v998, %v1000
      %v1009 = vsel %vm1007, %v1000, %v1002
      %v1010 = vsel %vm1007, %v1002, %v1004
      %v1011 = vsel %vm1007, %v1004, %v1006
      %v1013 = vsel %vm330, %v269, 0
      %v1016 = vsel %vm334, %v1008, 0
      %v1019 = vsel %vm334, %v1009, 0
      %v1022 = vsel %vm334, %v1010, 0
      %v1025 = vsel %vm334, %v1011, 0
      %1027 = vmatpush.bf16.msra.mxu0 0
      %1028 = vmatpush.bf16.msra.mxu0 0
      %1029 = vmatpush.bf16.msra.mxu0 0
      %1030 = vmatpush.bf16.msra.mxu0 0
      %1031 = vmatpush.bf16.msra.mxu0 0
      %1032 = vmatpush.bf16.msra.mxu0 0
      %1033 = vmatpush.bf16.msra.mxu0 0
      %1034 = vmatpush.bf16.msra.mxu0 %v1016
      %1035 = vmatmul.bf16.gmra.mxu0 %v1013
      %v1036 = vpop.f32.mrf.mxu0
      %v1037 = vadd.f32 0.0, %v1036
      %v1038 = vpop.f32.mrf.mxu0
      %1039 = vdwg.mxu0
      %1040 = vmatpush.bf16.msra.mxu0 0
      %1041 = vmatpush.bf16.msra.mxu0 0
      %1042 = vmatpush.bf16.msra.mxu0 0
      %1043 = vmatpush.bf16.msra.mxu0 0
      %1044 = vmatpush.bf16.msra.mxu0 0
      %1045 = vmatpush.bf16.msra.mxu0 0
      %1046 = vmatpush.bf16.msra.mxu0 0
      %1047 = vmatpush.bf16.msra.mxu0 %v1019
      %1048 = vmatmul.bf16.gmra.mxu0 %v1013
      %v1049 = vpop.f32.mrf.mxu0
      %v1050 = vadd.f32 0.0, %v1049
      %v1051 = vpop.f32.mrf.mxu0
      %1052 = vdwg.mxu0
      %1053 = vmatpush.bf16.msra.mxu0 0
      %1054 = vmatpush.bf16.msra.mxu0 0
      %1055 = vmatpush.bf16.msra.mxu0 0
      %1056 = vmatpush.bf16.msra.mxu0 0
      %1057 = vmatpush.bf16.msra.mxu0 0
      %1058 = vmatpush.bf16.msra.mxu0 0
      %1059 = vmatpush.bf16.msra.mxu0 0
      %1060 = vmatpush.bf16.msra.mxu0 %v1022
      %1061 = vmatmul.bf16.gmra.mxu0 %v1013
      %v1062 = vpop.f32.mrf.mxu0
      %v1063 = vadd.f32 0.0, %v1062
      %v1064 = vpop.f32.mrf.mxu0
      %1065 = vdwg.mxu0
      %1066 = vmatpush.bf16.msra.mxu0 0
      %1067 = vmatpush.bf16.msra.mxu0 0
      %1068 = vmatpush.bf16.msra.mxu0 0
      %1069 = vmatpush.bf16.msra.mxu0 0
      %1070 = vmatpush.bf16.msra.mxu0 0
      %1071 = vmatpush.bf16.msra.mxu0 0
      %1072 = vmatpush.bf16.msra.mxu0 0
      %1073 = vmatpush.bf16.msra.mxu0 %v1025
      %1074 = vmatmul.bf16.gmra.mxu0 %v1013
      %v1075 = vpop.f32.mrf.mxu0
      %v1076 = vadd.f32 0.0, %v1075
      %v1077 = vpop.f32.mrf.mxu0
      %1078 = vdwg.mxu0
      %v1079 = vadd.f32 %v993, %v1037
      %v1080 = vadd.f32 %v994, %v1050
      %v1081 = vadd.f32 %v995, %v1063
      %v1082 = vadd.f32 %v996, %v1076
      %1084 = vset.pattern.permute.xlu0 0
      %1085 = vperm.xlu0 %1084, %v279
      %v1086 = vpop.permute.xlu0 %1085
      %v1088 = vadd.f32 %v1079, %v1086
      %v1089 = vadd.f32 %v1080, %v1086
      %v1090 = vadd.f32 %v1081, %v1086
      %v1091 = vadd.f32 %v1082, %v1086
      %v1092 = vperm.slane %v256, 0
      %v1093 = vperm.slane %v257, 0
      %v1094 = vperm.slane %v258, 0
      %v1095 = vperm.slane %v259, 0
      %v1096 = vperm.slane %v260, 0
      %1102 = vrot.lane.b32.xlu0 %v1092, 57
      %v1103 = vpop.permute.xlu0 %1102
      %1104 = vrot.lane.b32.xlu0 %v1093, 57
      %v1105 = vpop.permute.xlu0 %1104
      %1106 = vrot.lane.b32.xlu0 %v1094, 57
      %v1107 = vpop.permute.xlu0 %1106
      %1108 = vrot.lane.b32.xlu0 %v1095, 57
      %v1109 = vpop.permute.xlu0 %1108
      %1110 = vrot.lane.b32.xlu0 %v1096, 57
      %v1111 = vpop.permute.xlu0 %1110
      %vm1112 = vcmask 465920
      %v1113 = vsel %vm1112, %v1103, %v1105
      %v1114 = vsel %vm1112, %v1105, %v1107
      %v1115 = vsel %vm1112, %v1107, %v1109
      %v1116 = vsel %vm1112, %v1109, %v1111
      %v1121 = vmul.f32 %v1088, %v1113
      %v1122 = vmul.f32 %v1089, %v1114
      %v1123 = vmul.f32 %v1090, %v1115
      %v1124 = vmul.f32 %v1091, %v1116
      %vm1125 = vcmask 1043456
      %v1126 = vsel %vm1125, %v1121, 0.0
      %v1127 = vsel %vm1125, %v1122, 0.0
      %v1128 = vadd.f32 %v1126, %v1127
      %v1129 = vsel %vm1125, %v1123, 0.0
      %v1130 = vadd.f32 %v1128, %v1129
      %vm1131 = vcmask 928768
      %v1132 = vsel %vm1131, %v1124, 0.0
      %v1133 = vadd.f32 %v1130, %v1132
      %1134 = vadd.xlane.f32.xlu0 %v1133
      %v1135 = vpop.xlane.xlu0 %1134
      %v1136 = vmul.f32 %v1121, %v1088
      %v1137 = vmul.f32 %v1122, %v1089
      %v1138 = vmul.f32 %v1123, %v1090
      %v1139 = vmul.f32 %v1124, %v1091
      %v1140 = vsel %vm1125, %v1136, 0.0
      %v1141 = vsel %vm1125, %v1137, 0.0
      %v1142 = vadd.f32 %v1140, %v1141
      %v1143 = vsel %vm1125, %v1138, 0.0
      %v1144 = vadd.f32 %v1142, %v1143
      %v1145 = vsel %vm1131, %v1139, 0.0
      %v1146 = vadd.f32 %v1144, %v1145
      %1147 = vadd.xlane.f32.xlu0 %v1146
      %v1148 = vpop.xlane.xlu0 %1147
      %v1149 = vmul.f32 %v1135, 0.00390625
      %v1150 = vmul.f32 %v1148, 0.00390625
      %v1151 = vmul.f32 %v1149, %v1149
      %v1152 = vsub.f32 %v1150, %v1151
      %v1153 = vsub.f32 %v1088, %v1149
      %v1154 = vsub.f32 %v1089, %v1149
      %v1155 = vsub.f32 %v1090, %v1149
      %v1156 = vsub.f32 %v1091, %v1149
      %v1157 = vadd.f32 %v1152, 1e-05
      %v1158 = vrsqrt.pop %v1157
      %v1159 = vmul.f32 %v1158, %v1157
      %v1160 = vmul.f32 %v1159, %v1158
      %v1161 = vmul.f32 0.5, %v1160
      %v1162 = vsub.f32 1.5, %v1161
      %v1163 = vmul.f32 %v1158, %v1162
      %vm1164 = vweird.f32 %v1157
      %vm1165 = vweird.f32 %v1158
      %vm1166 = vmor %vm1164, %vm1165
      %v1167 = vsel %vm1166, %v1158, %v1163
      %v1168 = vmul.f32 %v1153, %v1167
      %v1169 = vmul.f32 %v1154, %v1167
      %v1170 = vmul.f32 %v1155, %v1167
      %v1171 = vmul.f32 %v1156, %v1167
      %v1172 = vmax.f32 %v1168, 0.0
      %v1173 = vmax.f32 %v1169, 0.0
      %v1174 = vmax.f32 %v1170, 0.0
      %v1175 = vmax.f32 %v1171, 0.0
      %v1176 = vperm.slane %v256, 1
      %v1177 = vperm.slane %v257, 1
      %v1178 = vperm.slane %v258, 1
      %v1179 = vperm.slane %v259, 1
      %v1180 = vperm.slane %v260, 1
      %1185 = vrot.lane.b32.xlu0 %v1172, 69
      %v1186 = vpop.permute.xlu0 %1185
      %1187 = vrot.lane.b32.xlu0 %v1173, 69
      %v1188 = vpop.permute.xlu0 %1187
      %1189 = vrot.lane.b32.xlu0 %v1174, 69
      %v1190 = vpop.permute.xlu0 %1189
      %1191 = vrot.lane.b32.xlu0 %v1175, 69
      %v1192 = vpop.permute.xlu0 %1191
      %vm1193 = vcmask 564224
      %v1194 = vsel %vm1193, %v1186, %v1188
      %v1195 = vsel %vm1193, %v1188, %v1190
      %v1196 = vsel %vm1193, %v1190, %v1192
      %v1202 = vmul.f32 %v1176, %v1186
      %v1203 = vmul.f32 %v1177, %v1194
      %v1204 = vmul.f32 %v1178, %v1195
      %v1205 = vmul.f32 %v1179, %v1196
      %v1206 = vmul.f32 %v1180, %v1192
      %v1207 = vperm.slane %v256, 2
      %v1208 = vperm.slane %v257, 2
      %v1209 = vperm.slane %v258, 2
      %v1210 = vperm.slane %v259, 2
      %v1211 = vperm.slane %v260, 2
      %1212 = vrot.lane.b32.xlu0 %v1172, 73
      %v1213 = vpop.permute.xlu0 %1212
      %1214 = vrot.lane.b32.xlu0 %v1173, 73
      %v1215 = vpop.permute.xlu0 %1214
      %1216 = vrot.lane.b32.xlu0 %v1174, 73
      %v1217 = vpop.permute.xlu0 %1216
      %1218 = vrot.lane.b32.xlu0 %v1175, 73
      %v1219 = vpop.permute.xlu0 %1218
      %vm1220 = vcmask 596992
      %v1221 = vsel %vm1220, %v1213, %v1215
      %v1222 = vsel %vm1220, %v1215, %v1217
      %v1223 = vsel %vm1220, %v1217, %v1219
      %v1229 = vmul.f32 %v1207, %v1213
      %v1230 = vmul.f32 %v1208, %v1221
      %v1231 = vmul.f32 %v1209, %v1222
      %v1232 = vmul.f32 %v1210, %v1223
      %v1233 = vmul.f32 %v1211, %v1219
      %v1234 = vadd.f32 %v1202, %v1229
      %v1235 = vadd.f32 %v1203, %v1230
      %v1236 = vadd.f32 %v1204, %v1231
      %v1237 = vadd.f32 %v1205, %v1232
      %v1238 = vadd.f32 %v1206, %v1233
      %v1239 = vsub.f32 1.0, %v256
      %v1240 = vsub.f32 1.0, %v257
      %v1241 = vsub.f32 1.0, %v258
      %v1242 = vsub.f32 1.0, %v259
      %v1243 = vsub.f32 1.0, %v260
      %v1249 = vrot.slane %v256, 1
      %v1250 = vrot.slane %v257, 1
      %v1251 = vrot.slane %v258, 1
      %v1252 = vrot.slane %v259, 1
      %v1253 = vrot.slane %v260, 1
      %v1259 = vsub.f32 %v1239, %v1249
      %v1260 = vsub.f32 %v1240, %v1250
      %v1261 = vsub.f32 %v1241, %v1251
      %v1262 = vsub.f32 %v1242, %v1252
      %v1263 = vsub.f32 %v1243, %v1253
      %v1264 = vperm.slane %v1259, 1
      %v1265 = vperm.slane %v1260, 1
      %v1266 = vperm.slane %v1261, 1
      %v1267 = vperm.slane %v1262, 1
      %v1268 = vperm.slane %v1263, 1
      %1269 = vrot.lane.b32.xlu0 %v1172, 71
      %v1270 = vpop.permute.xlu0 %1269
      %1271 = vrot.lane.b32.xlu0 %v1173, 71
      %v1272 = vpop.permute.xlu0 %1271
      %1273 = vrot.lane.b32.xlu0 %v1174, 71
      %v1274 = vpop.permute.xlu0 %1273
      %1275 = vrot.lane.b32.xlu0 %v1175, 71
      %v1276 = vpop.permute.xlu0 %1275
      %vm1277 = vcmask 580608
      %v1278 = vsel %vm1277, %v1270, %v1272
      %v1279 = vsel %vm1277, %v1272, %v1274
      %v1280 = vsel %vm1277, %v1274, %v1276
      %v1286 = vmul.f32 %v1264, %v1270
      %v1287 = vmul.f32 %v1265, %v1278
      %v1288 = vmul.f32 %v1266, %v1279
      %v1289 = vmul.f32 %v1267, %v1280
      %v1290 = vmul.f32 %v1268, %v1276
      %v1291 = vadd.f32 %v1234, %v1286
      %v1292 = vadd.f32 %v1235, %v1287
      %v1293 = vadd.f32 %v1236, %v1288
      %v1294 = vadd.f32 %v1237, %v1289
      %v1295 = vadd.f32 %v1238, %v1290
      %v1296 = vperm.slane %v256, 3
      %v1297 = vperm.slane %v257, 3
      %v1298 = vperm.slane %v258, 3
      %v1299 = vperm.slane %v259, 3
      %v1300 = vperm.slane %v260, 3
      %1305 = vrot.lane.b32.xlu0 %v1292, 92
      %v1306 = vpop.permute.xlu0 %1305
      %1307 = vrot.lane.b32.xlu0 %v1293, 92
      %v1308 = vpop.permute.xlu0 %1307
      %1309 = vrot.lane.b32.xlu0 %v1294, 92
      %v1310 = vpop.permute.xlu0 %1309
      %1311 = vrot.lane.b32.xlu0 %v1295, 92
      %v1312 = vpop.permute.xlu0 %1311
      %vm1313 = vcmask 752640
      %v1314 = vsel %vm1313, %v1306, %v1308
      %v1315 = vsel %vm1313, %v1308, %v1310
      %v1316 = vsel %vm1313, %v1310, %v1312
      %v1322 = vmul.f32 %v1296, %v1306
      %v1323 = vmul.f32 %v1297, %v1314
      %v1324 = vmul.f32 %v1298, %v1315
      %v1325 = vmul.f32 %v1299, %v1316
      %v1326 = vmul.f32 %v1300, %v1312
      %v1327 = vperm.slane %v256, 4
      %v1328 = vperm.slane %v257, 4
      %v1329 = vperm.slane %v258, 4
      %v1330 = vperm.slane %v259, 4
      %v1331 = vperm.slane %v260, 4
      %1333 = vrot.lane.b32.xlu0 %v1291, 36
      %v1334 = vpop.permute.xlu0 %1333
      %1335 = vrot.lane.b32.xlu0 %v1292, 36
      %v1336 = vpop.permute.xlu0 %1335
      %1337 = vrot.lane.b32.xlu0 %v1293, 36
      %v1338 = vpop.permute.xlu0 %1337
      %1339 = vrot.lane.b32.xlu0 %v1294, 36
      %v1340 = vpop.permute.xlu0 %1339
      %vm1341 = vcmask 293888
      %v1342 = vsel %vm1341, %v1334, %v1336
      %v1343 = vsel %vm1341, %v1336, %v1338
      %v1344 = vsel %vm1341, %v1338, %v1340
      %v1350 = vmul.f32 %v1327, %v1334
      %v1351 = vmul.f32 %v1328, %v1342
      %v1352 = vmul.f32 %v1329, %v1343
      %v1353 = vmul.f32 %v1330, %v1344
      %v1354 = vmul.f32 %v1331, %v1340
      %v1355 = vadd.f32 %v1322, %v1350
      %v1356 = vadd.f32 %v1323, %v1351
      %v1357 = vadd.f32 %v1324, %v1352
      %v1358 = vadd.f32 %v1325, %v1353
      %v1359 = vadd.f32 %v1326, %v1354
      %v1360 = vperm.slane %v1259, 3
      %v1361 = vperm.slane %v1260, 3
      %v1362 = vperm.slane %v1261, 3
      %v1363 = vperm.slane %v1262, 3
      %v1364 = vperm.slane %v1263, 3
      %v1365 = vmul.f32 %v1360, %v1291
      %v1366 = vmul.f32 %v1361, %v1292
      %v1367 = vmul.f32 %v1362, %v1293
      %v1368 = vmul.f32 %v1363, %v1294
      %v1369 = vmul.f32 %v1364, %v1295
      %v1370 = vadd.f32 %v1355, %v1365
      %v1371 = vadd.f32 %v1356, %v1366
      %v1372 = vadd.f32 %v1357, %v1367
      %v1373 = vadd.f32 %v1358, %v1368
      %v1374 = vadd.f32 %v1359, %v1369
      %v1375 = vpack.c.bf16 %v1371, %v1370
      %v1376 = vpack.c.bf16 %v1373, %v1372
      %v1377 = vpack.c.bf16 %v1374, %v1374
      %v1380 = vunpack.c.l.b16 %v1375
      %v1381 = vunpack.c.h.b16 %v1375
      %v1382 = vunpack.c.l.b16 %v1376
      %v1383 = vunpack.c.h.b16 %v1376
      %v1384 = vpack.c.b16 %v1380, %v1380
      %v1385 = vpack.c.b16 %v1381, %v1381
      %v1386 = vpack.c.b16 %v1382, %v1382
      %v1387 = vpack.c.b16 %v1383, %v1383
      %1388 = vrot.lane.b32.xlu0 %v1384, 18
      %v1389 = vpop.permute.xlu0 %1388
      %1390 = vrot.lane.b32.xlu0 %v1385, 18
      %v1391 = vpop.permute.xlu0 %1390
      %1392 = vrot.lane.b32.xlu0 %v1386, 18
      %v1393 = vpop.permute.xlu0 %1392
      %1394 = vrot.lane.b32.xlu0 %v1387, 18
      %v1395 = vpop.permute.xlu0 %1394
      %vm1396 = vcmask 146432
      %v1397 = vsel %vm1396, %v1389, %v1391
      %v1398 = vsel %vm1396, %v1391, %v1393
      %v1399 = vsel %vm1396, %v1393, %v1395
      %v1401 = vsel %vm330, %v271, 0
      %v1404 = vsel %vm334, %v1397, 0
      %v1407 = vsel %vm334, %v1398, 0
      %v1410 = vsel %vm334, %v1399, 0
      %1412 = vmatpush.bf16.msra.mxu0 0
      %1413 = vmatpush.bf16.msra.mxu0 0
      %1414 = vmatpush.bf16.msra.mxu0 0
      %1415 = vmatpush.bf16.msra.mxu0 0
      %1416 = vmatpush.bf16.msra.mxu0 0
      %1417 = vmatpush.bf16.msra.mxu0 0
      %1418 = vmatpush.bf16.msra.mxu0 0
      %1419 = vmatpush.bf16.msra.mxu0 %v1404
      %1420 = vmatmul.bf16.gmra.mxu0 %v1401
      %v1421 = vpop.f32.mrf.mxu0
      %v1422 = vadd.f32 0.0, %v1421
      %v1423 = vpop.f32.mrf.mxu0
      %1424 = vdwg.mxu0
      %1425 = vmatpush.bf16.msra.mxu0 0
      %1426 = vmatpush.bf16.msra.mxu0 0
      %1427 = vmatpush.bf16.msra.mxu0 0
      %1428 = vmatpush.bf16.msra.mxu0 0
      %1429 = vmatpush.bf16.msra.mxu0 0
      %1430 = vmatpush.bf16.msra.mxu0 0
      %1431 = vmatpush.bf16.msra.mxu0 0
      %1432 = vmatpush.bf16.msra.mxu0 %v1407
      %1433 = vmatmul.bf16.gmra.mxu0 %v1401
      %v1434 = vpop.f32.mrf.mxu0
      %v1435 = vadd.f32 0.0, %v1434
      %v1436 = vpop.f32.mrf.mxu0
      %1437 = vdwg.mxu0
      %1438 = vmatpush.bf16.msra.mxu0 0
      %1439 = vmatpush.bf16.msra.mxu0 0
      %1440 = vmatpush.bf16.msra.mxu0 0
      %1441 = vmatpush.bf16.msra.mxu0 0
      %1442 = vmatpush.bf16.msra.mxu0 0
      %1443 = vmatpush.bf16.msra.mxu0 0
      %1444 = vmatpush.bf16.msra.mxu0 0
      %1445 = vmatpush.bf16.msra.mxu0 %v1410
      %1446 = vmatmul.bf16.gmra.mxu0 %v1401
      %v1447 = vpop.f32.mrf.mxu0
      %v1448 = vadd.f32 0.0, %v1447
      %v1449 = vpop.f32.mrf.mxu0
      %1450 = vdwg.mxu0
      %1451 = vrot.lane.b32.xlu0 %v1384, 19
      %v1452 = vpop.permute.xlu0 %1451
      %1453 = vrot.lane.b32.xlu0 %v1385, 19
      %v1454 = vpop.permute.xlu0 %1453
      %1455 = vrot.lane.b32.xlu0 %v1386, 19
      %v1456 = vpop.permute.xlu0 %1455
      %1457 = vrot.lane.b32.xlu0 %v1387, 19
      %v1458 = vpop.permute.xlu0 %1457
      %vm1459 = vcmask 154624
      %v1460 = vsel %vm1459, %v1452, %v1454
      %v1461 = vsel %vm1459, %v1454, %v1456
      %v1462 = vsel %vm1459, %v1456, %v1458
      %v1464 = vsel %vm330, %v270, 0
      %v1467 = vsel %vm334, %v1460, 0
      %v1470 = vsel %vm334, %v1461, 0
      %v1473 = vsel %vm334, %v1462, 0
      %1475 = vmatpush.bf16.msra.mxu0 0
      %1476 = vmatpush.bf16.msra.mxu0 0
      %1477 = vmatpush.bf16.msra.mxu0 0
      %1478 = vmatpush.bf16.msra.mxu0 0
      %1479 = vmatpush.bf16.msra.mxu0 0
      %1480 = vmatpush.bf16.msra.mxu0 0
      %1481 = vmatpush.bf16.msra.mxu0 0
      %1482 = vmatpush.bf16.msra.mxu0 %v1467
      %1483 = vmatmul.bf16.gmra.mxu0 %v1464
      %v1484 = vpop.f32.mrf.mxu0
      %v1485 = vadd.f32 %v1422, %v1484
      %v1486 = vpop.f32.mrf.mxu0
      %1487 = vdwg.mxu0
      %1488 = vmatpush.bf16.msra.mxu0 0
      %1489 = vmatpush.bf16.msra.mxu0 0
      %1490 = vmatpush.bf16.msra.mxu0 0
      %1491 = vmatpush.bf16.msra.mxu0 0
      %1492 = vmatpush.bf16.msra.mxu0 0
      %1493 = vmatpush.bf16.msra.mxu0 0
      %1494 = vmatpush.bf16.msra.mxu0 0
      %1495 = vmatpush.bf16.msra.mxu0 %v1470
      %1496 = vmatmul.bf16.gmra.mxu0 %v1464
      %v1497 = vpop.f32.mrf.mxu0
      %v1498 = vadd.f32 %v1435, %v1497
      %v1499 = vpop.f32.mrf.mxu0
      %1500 = vdwg.mxu0
      %1501 = vmatpush.bf16.msra.mxu0 0
      %1502 = vmatpush.bf16.msra.mxu0 0
      %1503 = vmatpush.bf16.msra.mxu0 0
      %1504 = vmatpush.bf16.msra.mxu0 0
      %1505 = vmatpush.bf16.msra.mxu0 0
      %1506 = vmatpush.bf16.msra.mxu0 0
      %1507 = vmatpush.bf16.msra.mxu0 0
      %1508 = vmatpush.bf16.msra.mxu0 %v1473
      %1509 = vmatmul.bf16.gmra.mxu0 %v1464
      %v1510 = vpop.f32.mrf.mxu0
      %v1511 = vadd.f32 %v1448, %v1510
      %v1512 = vpop.f32.mrf.mxu0
      %1513 = vdwg.mxu0
      %1514 = vrot.lane.b32.xlu0 %v1384, 17
      %v1515 = vpop.permute.xlu0 %1514
      %1516 = vrot.lane.b32.xlu0 %v1385, 17
      %v1517 = vpop.permute.xlu0 %1516
      %1518 = vrot.lane.b32.xlu0 %v1386, 17
      %v1519 = vpop.permute.xlu0 %1518
      %1520 = vrot.lane.b32.xlu0 %v1387, 17
      %v1521 = vpop.permute.xlu0 %1520
      %vm1522 = vcmask 138240
      %v1523 = vsel %vm1522, %v1515, %v1517
      %v1524 = vsel %vm1522, %v1517, %v1519
      %v1525 = vsel %vm1522, %v1519, %v1521
      %v1527 = vsel %vm330, %v272, 0
      %v1530 = vsel %vm334, %v1523, 0
      %v1533 = vsel %vm334, %v1524, 0
      %v1536 = vsel %vm334, %v1525, 0
      %1538 = vmatpush.bf16.msra.mxu0 0
      %1539 = vmatpush.bf16.msra.mxu0 0
      %1540 = vmatpush.bf16.msra.mxu0 0
      %1541 = vmatpush.bf16.msra.mxu0 0
      %1542 = vmatpush.bf16.msra.mxu0 0
      %1543 = vmatpush.bf16.msra.mxu0 0
      %1544 = vmatpush.bf16.msra.mxu0 0
      %1545 = vmatpush.bf16.msra.mxu0 %v1530
      %1546 = vmatmul.bf16.gmra.mxu0 %v1527
      %v1547 = vpop.f32.mrf.mxu0
      %v1548 = vadd.f32 0.0, %v1547
      %v1549 = vpop.f32.mrf.mxu0
      %1550 = vdwg.mxu0
      %1551 = vmatpush.bf16.msra.mxu0 0
      %1552 = vmatpush.bf16.msra.mxu0 0
      %1553 = vmatpush.bf16.msra.mxu0 0
      %1554 = vmatpush.bf16.msra.mxu0 0
      %1555 = vmatpush.bf16.msra.mxu0 0
      %1556 = vmatpush.bf16.msra.mxu0 0
      %1557 = vmatpush.bf16.msra.mxu0 0
      %1558 = vmatpush.bf16.msra.mxu0 %v1533
      %1559 = vmatmul.bf16.gmra.mxu0 %v1527
      %v1560 = vpop.f32.mrf.mxu0
      %v1561 = vadd.f32 0.0, %v1560
      %v1562 = vpop.f32.mrf.mxu0
      %1563 = vdwg.mxu0
      %1564 = vmatpush.bf16.msra.mxu0 0
      %1565 = vmatpush.bf16.msra.mxu0 0
      %1566 = vmatpush.bf16.msra.mxu0 0
      %1567 = vmatpush.bf16.msra.mxu0 0
      %1568 = vmatpush.bf16.msra.mxu0 0
      %1569 = vmatpush.bf16.msra.mxu0 0
      %1570 = vmatpush.bf16.msra.mxu0 0
      %1571 = vmatpush.bf16.msra.mxu0 %v1536
      %1572 = vmatmul.bf16.gmra.mxu0 %v1527
      %v1573 = vpop.f32.mrf.mxu0
      %v1574 = vadd.f32 0.0, %v1573
      %v1575 = vpop.f32.mrf.mxu0
      %1576 = vdwg.mxu0
      %v1577 = vadd.f32 %v1485, %v1548
      %v1578 = vadd.f32 %v1498, %v1561
      %v1579 = vadd.f32 %v1511, %v1574
      %1580 = vrot.lane.b32.xlu0 %v1384, 1
      %v1581 = vpop.permute.xlu0 %1580
      %1582 = vrot.lane.b32.xlu0 %v1385, 1
      %v1583 = vpop.permute.xlu0 %1582
      %1584 = vrot.lane.b32.xlu0 %v1386, 1
      %v1585 = vpop.permute.xlu0 %1584
      %1586 = vrot.lane.b32.xlu0 %v1387, 1
      %v1587 = vpop.permute.xlu0 %1586
      %vm1588 = vcmask 7168
      %v1589 = vsel %vm1588, %v1581, %v1583
      %v1590 = vsel %vm1588, %v1583, %v1585
      %v1591 = vsel %vm1588, %v1585, %v1587
      %v1593 = vsel %vm330, %v273, 0
      %v1596 = vsel %vm334, %v1589, 0
      %v1599 = vsel %vm334, %v1590, 0
      %v1602 = vsel %vm334, %v1591, 0
      %1604 = vmatpush.bf16.msra.mxu0 0
      %1605 = vmatpush.bf16.msra.mxu0 0
      %1606 = vmatpush.bf16.msra.mxu0 0
      %1607 = vmatpush.bf16.msra.mxu0 0
      %1608 = vmatpush.bf16.msra.mxu0 0
      %1609 = vmatpush.bf16.msra.mxu0 0
      %1610 = vmatpush.bf16.msra.mxu0 0
      %1611 = vmatpush.bf16.msra.mxu0 %v1596
      %1612 = vmatmul.bf16.gmra.mxu0 %v1593
      %v1613 = vpop.f32.mrf.mxu0
      %v1614 = vadd.f32 0.0, %v1613
      %v1615 = vpop.f32.mrf.mxu0
      %1616 = vdwg.mxu0
      %1617 = vmatpush.bf16.msra.mxu0 0
      %1618 = vmatpush.bf16.msra.mxu0 0
      %1619 = vmatpush.bf16.msra.mxu0 0
      %1620 = vmatpush.bf16.msra.mxu0 0
      %1621 = vmatpush.bf16.msra.mxu0 0
      %1622 = vmatpush.bf16.msra.mxu0 0
      %1623 = vmatpush.bf16.msra.mxu0 0
      %1624 = vmatpush.bf16.msra.mxu0 %v1599
      %1625 = vmatmul.bf16.gmra.mxu0 %v1593
      %v1626 = vpop.f32.mrf.mxu0
      %v1627 = vadd.f32 0.0, %v1626
      %v1628 = vpop.f32.mrf.mxu0
      %1629 = vdwg.mxu0
      %1630 = vmatpush.bf16.msra.mxu0 0
      %1631 = vmatpush.bf16.msra.mxu0 0
      %1632 = vmatpush.bf16.msra.mxu0 0
      %1633 = vmatpush.bf16.msra.mxu0 0
      %1634 = vmatpush.bf16.msra.mxu0 0
      %1635 = vmatpush.bf16.msra.mxu0 0
      %1636 = vmatpush.bf16.msra.mxu0 0
      %1637 = vmatpush.bf16.msra.mxu0 %v1602
      %1638 = vmatmul.bf16.gmra.mxu0 %v1593
      %v1639 = vpop.f32.mrf.mxu0
      %v1640 = vadd.f32 0.0, %v1639
      %v1641 = vpop.f32.mrf.mxu0
      %1642 = vdwg.mxu0
      %v1643 = vadd.f32 %v1577, %v1614
      %v1644 = vadd.f32 %v1578, %v1627
      %v1645 = vadd.f32 %v1579, %v1640
      %v1647 = vsel %vm330, %v274, 0
      %v1650 = vsel %vm334, %v1385, 0
      %v1653 = vsel %vm334, %v1386, 0
      %v1656 = vsel %vm334, %v1387, 0
      %1658 = vmatpush.bf16.msra.mxu0 0
      %1659 = vmatpush.bf16.msra.mxu0 0
      %1660 = vmatpush.bf16.msra.mxu0 0
      %1661 = vmatpush.bf16.msra.mxu0 0
      %1662 = vmatpush.bf16.msra.mxu0 0
      %1663 = vmatpush.bf16.msra.mxu0 0
      %1664 = vmatpush.bf16.msra.mxu0 0
      %1665 = vmatpush.bf16.msra.mxu0 %v1650
      %1666 = vmatmul.bf16.gmra.mxu0 %v1647
      %v1667 = vpop.f32.mrf.mxu0
      %v1668 = vadd.f32 0.0, %v1667
      %v1669 = vpop.f32.mrf.mxu0
      %1670 = vdwg.mxu0
      %1671 = vmatpush.bf16.msra.mxu0 0
      %1672 = vmatpush.bf16.msra.mxu0 0
      %1673 = vmatpush.bf16.msra.mxu0 0
      %1674 = vmatpush.bf16.msra.mxu0 0
      %1675 = vmatpush.bf16.msra.mxu0 0
      %1676 = vmatpush.bf16.msra.mxu0 0
      %1677 = vmatpush.bf16.msra.mxu0 0
      %1678 = vmatpush.bf16.msra.mxu0 %v1653
      %1679 = vmatmul.bf16.gmra.mxu0 %v1647
      %v1680 = vpop.f32.mrf.mxu0
      %v1681 = vadd.f32 0.0, %v1680
      %v1682 = vpop.f32.mrf.mxu0
      %1683 = vdwg.mxu0
      %1684 = vmatpush.bf16.msra.mxu0 0
      %1685 = vmatpush.bf16.msra.mxu0 0
      %1686 = vmatpush.bf16.msra.mxu0 0
      %1687 = vmatpush.bf16.msra.mxu0 0
      %1688 = vmatpush.bf16.msra.mxu0 0
      %1689 = vmatpush.bf16.msra.mxu0 0
      %1690 = vmatpush.bf16.msra.mxu0 0
      %1691 = vmatpush.bf16.msra.mxu0 %v1656
      %1692 = vmatmul.bf16.gmra.mxu0 %v1647
      %v1693 = vpop.f32.mrf.mxu0
      %v1694 = vadd.f32 0.0, %v1693
      %v1695 = vpop.f32.mrf.mxu0
      %1696 = vdwg.mxu0
      %v1697 = vadd.f32 %v1643, %v1668
      %v1698 = vadd.f32 %v1644, %v1681
      %v1699 = vadd.f32 %v1645, %v1694
      %v1701 = vunpack.c.l.b16 %v1377
      %v1702 = vpack.c.b16 %v1701, %v1701
      %1703 = vrot.lane.b32.xlu0 %v1385, 127
      %v1704 = vpop.permute.xlu0 %1703
      %1705 = vrot.lane.b32.xlu0 %v1386, 127
      %v1706 = vpop.permute.xlu0 %1705
      %1707 = vrot.lane.b32.xlu0 %v1387, 127
      %v1708 = vpop.permute.xlu0 %1707
      %1709 = vrot.lane.b32.xlu0 %v1702, 127
      %v1710 = vpop.permute.xlu0 %1709
      %vm1711 = vcmask 1039360
      %v1712 = vsel %vm1711, %v1704, %v1706
      %v1713 = vsel %vm1711, %v1706, %v1708
      %v1714 = vsel %vm1711, %v1708, %v1710
      %v1716 = vsel %vm330, %v275, 0
      %v1719 = vsel %vm334, %v1712, 0
      %v1722 = vsel %vm334, %v1713, 0
      %v1725 = vsel %vm334, %v1714, 0
      %1727 = vmatpush.bf16.msra.mxu0 0
      %1728 = vmatpush.bf16.msra.mxu0 0
      %1729 = vmatpush.bf16.msra.mxu0 0
      %1730 = vmatpush.bf16.msra.mxu0 0
      %1731 = vmatpush.bf16.msra.mxu0 0
      %1732 = vmatpush.bf16.msra.mxu0 0
      %1733 = vmatpush.bf16.msra.mxu0 0
      %1734 = vmatpush.bf16.msra.mxu0 %v1719
      %1735 = vmatmul.bf16.gmra.mxu0 %v1716
      %v1736 = vpop.f32.mrf.mxu0
      %v1737 = vadd.f32 0.0, %v1736
      %v1738 = vpop.f32.mrf.mxu0
      %1739 = vdwg.mxu0
      %1740 = vmatpush.bf16.msra.mxu0 0
      %1741 = vmatpush.bf16.msra.mxu0 0
      %1742 = vmatpush.bf16.msra.mxu0 0
      %1743 = vmatpush.bf16.msra.mxu0 0
      %1744 = vmatpush.bf16.msra.mxu0 0
      %1745 = vmatpush.bf16.msra.mxu0 0
      %1746 = vmatpush.bf16.msra.mxu0 0
      %1747 = vmatpush.bf16.msra.mxu0 %v1722
      %1748 = vmatmul.bf16.gmra.mxu0 %v1716
      %v1749 = vpop.f32.mrf.mxu0
      %v1750 = vadd.f32 0.0, %v1749
      %v1751 = vpop.f32.mrf.mxu0
      %1752 = vdwg.mxu0
      %1753 = vmatpush.bf16.msra.mxu0 0
      %1754 = vmatpush.bf16.msra.mxu0 0
      %1755 = vmatpush.bf16.msra.mxu0 0
      %1756 = vmatpush.bf16.msra.mxu0 0
      %1757 = vmatpush.bf16.msra.mxu0 0
      %1758 = vmatpush.bf16.msra.mxu0 0
      %1759 = vmatpush.bf16.msra.mxu0 0
      %1760 = vmatpush.bf16.msra.mxu0 %v1725
      %1761 = vmatmul.bf16.gmra.mxu0 %v1716
      %v1762 = vpop.f32.mrf.mxu0
      %v1763 = vadd.f32 0.0, %v1762
      %v1764 = vpop.f32.mrf.mxu0
      %1765 = vdwg.mxu0
      %v1766 = vadd.f32 %v1697, %v1737
      %v1767 = vadd.f32 %v1698, %v1750
      %v1768 = vadd.f32 %v1699, %v1763
      %1769 = vrot.lane.b32.xlu0 %v1385, 111
      %v1770 = vpop.permute.xlu0 %1769
      %1771 = vrot.lane.b32.xlu0 %v1386, 111
      %v1772 = vpop.permute.xlu0 %1771
      %1773 = vrot.lane.b32.xlu0 %v1387, 111
      %v1774 = vpop.permute.xlu0 %1773
      %1775 = vrot.lane.b32.xlu0 %v1702, 111
      %v1776 = vpop.permute.xlu0 %1775
      %vm1777 = vcmask 908288
      %v1778 = vsel %vm1777, %v1770, %v1772
      %v1779 = vsel %vm1777, %v1772, %v1774
      %v1780 = vsel %vm1777, %v1774, %v1776
      %v1782 = vsel %vm330, %v276, 0
      %v1785 = vsel %vm334, %v1778, 0
      %v1788 = vsel %vm334, %v1779, 0
      %v1791 = vsel %vm334, %v1780, 0
      %1793 = vmatpush.bf16.msra.mxu0 0
      %1794 = vmatpush.bf16.msra.mxu0 0
      %1795 = vmatpush.bf16.msra.mxu0 0
      %1796 = vmatpush.bf16.msra.mxu0 0
      %1797 = vmatpush.bf16.msra.mxu0 0
      %1798 = vmatpush.bf16.msra.mxu0 0
      %1799 = vmatpush.bf16.msra.mxu0 0
      %1800 = vmatpush.bf16.msra.mxu0 %v1785
      %1801 = vmatmul.bf16.gmra.mxu0 %v1782
      %v1802 = vpop.f32.mrf.mxu0
      %v1803 = vadd.f32 0.0, %v1802
      %v1804 = vpop.f32.mrf.mxu0
      %1805 = vdwg.mxu0
      %1806 = vmatpush.bf16.msra.mxu0 0
      %1807 = vmatpush.bf16.msra.mxu0 0
      %1808 = vmatpush.bf16.msra.mxu0 0
      %1809 = vmatpush.bf16.msra.mxu0 0
      %1810 = vmatpush.bf16.msra.mxu0 0
      %1811 = vmatpush.bf16.msra.mxu0 0
      %1812 = vmatpush.bf16.msra.mxu0 0
      %1813 = vmatpush.bf16.msra.mxu0 %v1788
      %1814 = vmatmul.bf16.gmra.mxu0 %v1782
      %v1815 = vpop.f32.mrf.mxu0
      %v1816 = vadd.f32 0.0, %v1815
      %v1817 = vpop.f32.mrf.mxu0
      %1818 = vdwg.mxu0
      %1819 = vmatpush.bf16.msra.mxu0 0
      %1820 = vmatpush.bf16.msra.mxu0 0
      %1821 = vmatpush.bf16.msra.mxu0 0
      %1822 = vmatpush.bf16.msra.mxu0 0
      %1823 = vmatpush.bf16.msra.mxu0 0
      %1824 = vmatpush.bf16.msra.mxu0 0
      %1825 = vmatpush.bf16.msra.mxu0 0
      %1826 = vmatpush.bf16.msra.mxu0 %v1791
      %1827 = vmatmul.bf16.gmra.mxu0 %v1782
      %v1828 = vpop.f32.mrf.mxu0
      %v1829 = vadd.f32 0.0, %v1828
      %v1830 = vpop.f32.mrf.mxu0
      %1831 = vdwg.mxu0
      %v1832 = vadd.f32 %v1766, %v1803
      %v1833 = vadd.f32 %v1767, %v1816
      %v1834 = vadd.f32 %v1768, %v1829
      %1835 = vrot.lane.b32.xlu0 %v1385, 110
      %v1836 = vpop.permute.xlu0 %1835
      %1837 = vrot.lane.b32.xlu0 %v1386, 110
      %v1838 = vpop.permute.xlu0 %1837
      %1839 = vrot.lane.b32.xlu0 %v1387, 110
      %v1840 = vpop.permute.xlu0 %1839
      %1841 = vrot.lane.b32.xlu0 %v1702, 110
      %v1842 = vpop.permute.xlu0 %1841
      %vm1843 = vcmask 900096
      %v1844 = vsel %vm1843, %v1836, %v1838
      %v1845 = vsel %vm1843, %v1838, %v1840
      %v1846 = vsel %vm1843, %v1840, %v1842
      %v1848 = vsel %vm330, %v277, 0
      %v1851 = vsel %vm334, %v1844, 0
      %v1854 = vsel %vm334, %v1845, 0
      %v1857 = vsel %vm334, %v1846, 0
      %1859 = vmatpush.bf16.msra.mxu0 0
      %1860 = vmatpush.bf16.msra.mxu0 0
      %1861 = vmatpush.bf16.msra.mxu0 0
      %1862 = vmatpush.bf16.msra.mxu0 0
      %1863 = vmatpush.bf16.msra.mxu0 0
      %1864 = vmatpush.bf16.msra.mxu0 0
      %1865 = vmatpush.bf16.msra.mxu0 0
      %1866 = vmatpush.bf16.msra.mxu0 %v1851
      %1867 = vmatmul.bf16.gmra.mxu0 %v1848
      %v1868 = vpop.f32.mrf.mxu0
      %v1869 = vadd.f32 0.0, %v1868
      %v1870 = vpop.f32.mrf.mxu0
      %1871 = vdwg.mxu0
      %1872 = vmatpush.bf16.msra.mxu0 0
      %1873 = vmatpush.bf16.msra.mxu0 0
      %1874 = vmatpush.bf16.msra.mxu0 0
      %1875 = vmatpush.bf16.msra.mxu0 0
      %1876 = vmatpush.bf16.msra.mxu0 0
      %1877 = vmatpush.bf16.msra.mxu0 0
      %1878 = vmatpush.bf16.msra.mxu0 0
      %1879 = vmatpush.bf16.msra.mxu0 %v1854
      %1880 = vmatmul.bf16.gmra.mxu0 %v1848
      %v1881 = vpop.f32.mrf.mxu0
      %v1882 = vadd.f32 0.0, %v1881
      %v1883 = vpop.f32.mrf.mxu0
      %1884 = vdwg.mxu0
      %1885 = vmatpush.bf16.msra.mxu0 0
      %1886 = vmatpush.bf16.msra.mxu0 0
      %1887 = vmatpush.bf16.msra.mxu0 0
      %1888 = vmatpush.bf16.msra.mxu0 0
      %1889 = vmatpush.bf16.msra.mxu0 0
      %1890 = vmatpush.bf16.msra.mxu0 0
      %1891 = vmatpush.bf16.msra.mxu0 0
      %1892 = vmatpush.bf16.msra.mxu0 %v1857
      %1893 = vmatmul.bf16.gmra.mxu0 %v1848
      %v1894 = vpop.f32.mrf.mxu0
      %v1895 = vadd.f32 0.0, %v1894
      %v1896 = vpop.f32.mrf.mxu0
      %1897 = vdwg.mxu0
      %v1898 = vadd.f32 %v1832, %v1869
      %v1899 = vadd.f32 %v1833, %v1882
      %v1900 = vadd.f32 %v1834, %v1895
      %1901 = vrot.lane.b32.xlu0 %v1385, 109
      %v1902 = vpop.permute.xlu0 %1901
      %1903 = vrot.lane.b32.xlu0 %v1386, 109
      %v1904 = vpop.permute.xlu0 %1903
      %1905 = vrot.lane.b32.xlu0 %v1387, 109
      %v1906 = vpop.permute.xlu0 %1905
      %1907 = vrot.lane.b32.xlu0 %v1702, 109
      %v1908 = vpop.permute.xlu0 %1907
      %vm1909 = vcmask 891904
      %v1910 = vsel %vm1909, %v1902, %v1904
      %v1911 = vsel %vm1909, %v1904, %v1906
      %v1912 = vsel %vm1909, %v1906, %v1908
      %v1914 = vsel %vm330, %v278, 0
      %v1917 = vsel %vm334, %v1910, 0
      %v1920 = vsel %vm334, %v1911, 0
      %v1923 = vsel %vm334, %v1912, 0
      %1925 = vmatpush.bf16.msra.mxu0 0
      %1926 = vmatpush.bf16.msra.mxu0 0
      %1927 = vmatpush.bf16.msra.mxu0 0
      %1928 = vmatpush.bf16.msra.mxu0 0
      %1929 = vmatpush.bf16.msra.mxu0 0
      %1930 = vmatpush.bf16.msra.mxu0 0
      %1931 = vmatpush.bf16.msra.mxu0 0
      %1932 = vmatpush.bf16.msra.mxu0 %v1917
      %1933 = vmatmul.bf16.gmra.mxu0 %v1914
      %v1934 = vpop.f32.mrf.mxu0
      %v1935 = vadd.f32 0.0, %v1934
      %v1936 = vpop.f32.mrf.mxu0
      %1937 = vdwg.mxu0
      %1938 = vmatpush.bf16.msra.mxu0 0
      %1939 = vmatpush.bf16.msra.mxu0 0
      %1940 = vmatpush.bf16.msra.mxu0 0
      %1941 = vmatpush.bf16.msra.mxu0 0
      %1942 = vmatpush.bf16.msra.mxu0 0
      %1943 = vmatpush.bf16.msra.mxu0 0
      %1944 = vmatpush.bf16.msra.mxu0 0
      %1945 = vmatpush.bf16.msra.mxu0 %v1920
      %1946 = vmatmul.bf16.gmra.mxu0 %v1914
      %v1947 = vpop.f32.mrf.mxu0
      %v1948 = vadd.f32 0.0, %v1947
      %v1949 = vpop.f32.mrf.mxu0
      %1950 = vdwg.mxu0
      %1951 = vmatpush.bf16.msra.mxu0 0
      %1952 = vmatpush.bf16.msra.mxu0 0
      %1953 = vmatpush.bf16.msra.mxu0 0
      %1954 = vmatpush.bf16.msra.mxu0 0
      %1955 = vmatpush.bf16.msra.mxu0 0
      %1956 = vmatpush.bf16.msra.mxu0 0
      %1957 = vmatpush.bf16.msra.mxu0 0
      %1958 = vmatpush.bf16.msra.mxu0 %v1923
      %1959 = vmatmul.bf16.gmra.mxu0 %v1914
      %v1960 = vpop.f32.mrf.mxu0
      %v1961 = vadd.f32 0.0, %v1960
      %v1962 = vpop.f32.mrf.mxu0
      %1963 = vdwg.mxu0
      %v1964 = vadd.f32 %v1898, %v1935
      %v1965 = vadd.f32 %v1899, %v1948
      %v1966 = vadd.f32 %v1900, %v1961
      %1968 = vset.pattern.permute.xlu0 0
      %1969 = vperm.xlu0 %1968, %v280
      %v1970 = vpop.permute.xlu0 %1969
      %v1972 = vadd.f32 %v1964, %v1970
      %v1973 = vadd.f32 %v1965, %v1970
      %v1974 = vadd.f32 %v1966, %v1970
      %v1975 = vmul.f32 %v1972, %v1093
      %v1976 = vmul.f32 %v1973, %v1094
      %v1977 = vmul.f32 %v1974, %v1095
      %v1978 = vsel %vm1125, %v1975, 0.0
      %v1979 = vsel %vm1125, %v1976, 0.0
      %v1980 = vadd.f32 %v1978, %v1979
      %v1981 = vsel %vm1125, %v1977, 0.0
      %v1982 = vadd.f32 %v1980, %v1981
      %1983 = vadd.xlane.f32.xlu0 %v1982
      %v1984 = vpop.xlane.xlu0 %1983
      %v1985 = vmul.f32 %v1975, %v1972
      %v1986 = vmul.f32 %v1976, %v1973
      %v1987 = vmul.f32 %v1977, %v1974
      %v1988 = vsel %vm1125, %v1985, 0.0
      %v1989 = vsel %vm1125, %v1986, 0.0
      %v1990 = vadd.f32 %v1988, %v1989
      %v1991 = vsel %vm1125, %v1987, 0.0
      %v1992 = vadd.f32 %v1990, %v1991
      %1993 = vadd.xlane.f32.xlu0 %v1992
      %v1994 = vpop.xlane.xlu0 %1993
      %v1995 = vmul.f32 %v1984, 0.00390625
      %v1996 = vmul.f32 %v1994, 0.00390625
      %v1997 = vmul.f32 %v1995, %v1995
      %v1998 = vsub.f32 %v1996, %v1997
      %v1999 = vsub.f32 %v1972, %v1995
      %v2000 = vsub.f32 %v1973, %v1995
      %v2001 = vsub.f32 %v1974, %v1995
      %v2002 = vadd.f32 %v1998, 1e-05
      %v2003 = vrsqrt.pop %v2002
      %v2004 = vmul.f32 %v2003, %v2002
      %v2005 = vmul.f32 %v2004, %v2003
      %v2006 = vmul.f32 0.5, %v2005
      %v2007 = vsub.f32 1.5, %v2006
      %v2008 = vmul.f32 %v2003, %v2007
      %vm2009 = vweird.f32 %v2002
      %vm2010 = vweird.f32 %v2003
      %vm2011 = vmor %vm2009, %vm2010
      %v2012 = vsel %vm2011, %v2003, %v2008
      %v2013 = vmul.f32 %v1999, %v2012
      %v2014 = vmul.f32 %v2000, %v2012
      %v2015 = vmul.f32 %v2001, %v2012
      %v2016 = vrot.slane %v253, 4
      %v2017 = vrot.slane %v254, 4
      %v2018 = vsel %vm1125, %v2016, %v2017
      %v2023 = vrot.slane %v2014, 4
      %v2024 = vsel %vm1125, %v2013, %v2023
      %v2026 = vadd.f32 %v2018, %v2024
      %v2027 = vadd.f32 %v2017, %v2015
      %2028 = vst [vmem:[%s251] sm:$0xff] %v2026
      %2029 = vst [vmem:[%s251 + $0x8] sm:$0xf] %v2027
      %p2030 = scmp.lt.s32.totalorder %s17, 1
      %s2031 = scalar_select %p2030, %s17, 1
      %s2032 = smul.addr %s2031, 3
      %s2033 = smul.addr %s2032, 4
      %s2034 = scalar_lea.vmem %s6, %s2033
      // Predicated region
      $region45: #{residual_block.1} parent=43 // pred_check
        %p2035 = pneg %p166
      $region46: #{residual_block.1} parent=43 // pred_check_branch
        %2037 = sbr.rel (%p2035) target = $region48
      $region47: #{residual_block.1} parent=43 // pred_region
        _
      $region48: #{residual_block.1} parent=43 // pred_fallthru
        _
    $region44: #{residual_block.1} parent=5 // pred_fallthru
      _
    %p2038 = scmp.le.s32.totalorder 2, %s12
    // Predicated region
    $region49: #{residual_block.1} parent=5 // pred_check
      %p2039 = pneg %p2038
    $region50: #{residual_block.1} parent=5 // pred_check_branch
      %2041 = sbr.rel (%p2039) target = $region52
    $region51: #{residual_block.1} parent=5 // pred_region
      %s2042 = ssub.s32 %s12, 2
      // Predicated region
      $region53: #{residual_block.1} parent=51 // pred_check
        %p2043 = pneg %p172
      $region54: #{residual_block.1} parent=51 // pred_check_branch
        %2045 = sbr.rel (%p2043) target = $region56
      $region55: #{residual_block.1} parent=51 // pred_region
        %p2046 = scmp.lt.s32.totalorder %s18, 1
        %s2047 = scalar_select %p2046, %s18, 1
        %s2048 = smul.addr %s2047, 3
        %s2049 = smul.addr %s2048, 4
        %s2050 = scalar_lea.vmem %s6, %s2049
      $region56: #{residual_block.1} parent=51 // pred_fallthru
        _
    $region52: #{residual_block.1} parent=5 // pred_fallthru
      _
  $region6: #{residual_block.1} parent=0 // loop_footer
    %s16 = sadd.s32 1, %s12
  $region7: #{residual_block.1} parent=0 // loop_footer_branch
    %11 = sbr.rel target = $region3
  $region8: #{residual_block.1} parent=0 // loop_exit
    _

</llo_original>
